<compile_context>
chip_gen: v7x
topology: tpu7x:2x2x1
jax: 0.10.0
libtpu: 0.0.40
codegen_flags: <defaults>
</compile_context>

<pallas_src>
import jax
import jax.numpy as jnp
from jax.experimental import pallas as pl
from jax.experimental.pallas import tpu as pltpu

HIDDEN_SIZE = 32
INPUT_SIZE = 22
NUM_LAYER = 2

# ---- packed weight-slab row layout (static offsets, last dim = HIDDEN_SIZE) ----
R_WIH0 = 0                      # (INPUT_SIZE, H)   layer-0 input weights, transposed
R_WHH0 = 24                     # (H, H)            layer-0 recurrent weights, transposed
R_W1 = 56                       # (2H, H)           [w_ih1^T ; w_hh1^T] fused layer-1 weights
R_B0 = 120                      # (1, H)            layer-0 combined bias (b_ih + b_hh)
R_B1 = 121                      # (1, H)            layer-1 combined bias
R_WOUT = 122                    # (1, H)            output Linear weight row
R_BOUT = 123                    # [row, 0]          output Linear bias scalar
R_TOTAL = 128                   # padded row count


def rnn_kernel(x_ref,        # (B, T, I)      batch-first input
               h0_ref,       # (2, B, H)      initial hidden state per layer
               w_ref,        # (R_TOTAL, H)   packed weight slab
               r_out_ref,    # (B, T*H)       last-layer outputs, lane-dense
               outs_ref,     # (B, 1)         Linear(h_state[-1])
               h_out_ref):   # (2, B, H)      final hidden state per layer
    B, T, I = x_ref.shape
    H = h0_ref.shape[-1]

    # ---- carve up the packed weight slab (static slices) ----
    w_ih0 = w_ref[R_WIH0:R_WIH0 + I, :]          # (I, H)
    w_hh0 = w_ref[R_WHH0:R_WHH0 + H, :]          # (H, H)
    w1 = w_ref[R_W1:R_W1 + 2 * H, :]             # (2H, H)
    b0 = w_ref[R_B0:R_B0 + 1, :]                 # (1, H)
    b1 = w_ref[R_B1:R_B1 + 1, :]                 # (1, H)
    w_out = w_ref[R_WOUT:R_WOUT + 1, :]          # (1, H)
    b_out = w_ref[R_BOUT:R_BOUT + 1, 0:1]        # (1, 1)

    # ---- batched layer-0 input projection for all time steps ----
    # (B*T, I) @ (I, H): one MXU matmul instead of T tiny ones.
    x2d = x_ref[...].reshape(B * T, I)
    xw0 = (jnp.dot(x2d, w_ih0, preferred_element_type=jnp.float32)
           + b0).reshape(B, T, H)

    # ---- fused, fully-unrolled recurrence over both layers ----
    h0 = h0_ref[0]                               # (B, H) layer-0 hidden state
    h1 = h0_ref[1]                               # (B, H) layer-1 hidden state
    b1_b = jnp.broadcast_to(b1, (B, H))          # hoisted out of the loop
    hs = []
    for t in range(T):                           # T is static (=8): full unroll
        h0 = jnp.tanh(
            xw0[:, t, :]
            + jnp.dot(h0, w_hh0, preferred_element_type=jnp.float32))
        h1 = jnp.tanh(
            jnp.dot(jnp.concatenate([h0, h1], axis=-1), w1,
                    preferred_element_type=jnp.float32)
            + b1_b)
        hs.append(h1)

    # Single lane-dense store of all per-step layer-1 outputs.
    r_out_ref[...] = jnp.concatenate(hs, axis=-1)          # (B, T*H)

    h_out_ref[0] = h0
    h_out_ref[1] = h1

    # ---- output head: (B,H)@(H,1) done on VPU/XLU (mul + lane reduce) ----
    outs_ref[...] = (jnp.sum(h1 * w_out, axis=-1, keepdims=True) + b_out)


def prepare_weights(params):
    """One-time weight prep: transpose, fold biases, pack into one VMEM slab."""
    H, I = HIDDEN_SIZE, INPUT_SIZE
    slab = jnp.zeros((R_TOTAL, H), jnp.float32)
    slab = slab.at[R_WIH0:R_WIH0 + I].set(params["w_ih_l0"].T)
    slab = slab.at[R_WHH0:R_WHH0 + H].set(params["w_hh_l0"].T)
    slab = slab.at[R_W1:R_W1 + H].set(params["w_ih_l1"].T)
    slab = slab.at[R_W1 + H:R_W1 + 2 * H].set(params["w_hh_l1"].T)
    slab = slab.at[R_B0].set(params["b_ih_l0"] + params["b_hh_l0"])
    slab = slab.at[R_B1].set(params["b_ih_l1"] + params["b_hh_l1"])
    slab = slab.at[R_WOUT].set(params["w_out"].reshape(H))
    slab = slab.at[R_BOUT, 0].set(params["b_out"][0])
    return slab


@jax.jit
def rnn_forward(x, h_state, w_slab):
    """x: (B, T, INPUT_SIZE) f32, h_state: (NUM_LAYER, B, HIDDEN) f32,
    w_slab: (R_TOTAL, HIDDEN) f32 from prepare_weights()."""
    B, T, _ = x.shape
    H = HIDDEN_SIZE

    vmem = pl.BlockSpec(memory_space=pltpu.MemorySpace.VMEM)

    r_out_flat, outs, h_out = pl.pallas_call(
        rnn_kernel,
        out_shape=(
            jax.ShapeDtypeStruct((B, T * H), jnp.float32),          # r_out (lane-dense)
            jax.ShapeDtypeStruct((B, 1), jnp.float32),              # outs
            jax.ShapeDtypeStruct((NUM_LAYER, B, H), jnp.float32),   # h_state out
        ),
        in_specs=[vmem, vmem, vmem],
        out_specs=(vmem, vmem, vmem),
    )(x, h_state, w_slab)

    return r_out_flat.reshape(B, T, H), outs, h_out


def rnn_reference(x, h_state, params):
    """Pure-JAX reference matching torch.nn.RNN(batch_first=True) semantics."""
    B, T, _ = x.shape
    hs = []
    seq = x
    for layer in range(NUM_LAYER):
        sfx = f"_l{layer}"
        w_ih, w_hh = params["w_ih" + sfx], params["w_hh" + sfx]
        b_ih, b_hh = params["b_ih" + sfx], params["b_hh" + sfx]
        h = h_state[layer]
        outs_t = []
        for t in range(T):
            h = jnp.tanh(seq[:, t, :] @ w_ih.T + b_ih + h @ w_hh.T + b_hh)
            outs_t.append(h)
        seq = jnp.stack(outs_t, axis=1)
        hs.append(h)
    h_out = jnp.stack(hs, axis=0)
    outs = h_out[-1] @ params["w_out"].T + params["b_out"]
    return seq, outs, h_out


def init_params(key):
    """Deterministic init mirroring PyTorch shapes (U(-1/sqrt(H), 1/sqrt(H)))."""
    stdv = 1.0 / jnp.sqrt(jnp.float32(HIDDEN_SIZE))
    names_shapes = [
        ("w_ih_l0", (HIDDEN_SIZE, INPUT_SIZE)),
        ("w_hh_l0", (HIDDEN_SIZE, HIDDEN_SIZE)),
        ("b_ih_l0", (HIDDEN_SIZE,)),
        ("b_hh_l0", (HIDDEN_SIZE,)),
        ("w_ih_l1", (HIDDEN_SIZE, HIDDEN_SIZE)),
        ("w_hh_l1", (HIDDEN_SIZE, HIDDEN_SIZE)),
        ("b_ih_l1", (HIDDEN_SIZE,)),
        ("b_hh_l1", (HIDDEN_SIZE,)),
        ("w_out", (1, HIDDEN_SIZE)),
        ("b_out", (1,)),
    ]
    params = {}
    keys = jax.random.split(key, len(names_shapes))
    for k, (name, shape) in zip(keys, names_shapes):
        params[name] = jax.random.uniform(
            k, shape, jnp.float32, minval=-stdv, maxval=stdv)
    return params


if __name__ == "__main__":
    B, T = 2, 8
    root = jax.random.PRNGKey(0)
    k_x, k_h, k_p = jax.random.split(root, 3)

    x = jax.random.normal(k_x, (B, T, INPUT_SIZE), jnp.float32)
    h_state = jax.random.normal(k_h, (NUM_LAYER, B, HIDDEN_SIZE), jnp.float32)
    params = init_params(k_p)
    w_slab = prepare_weights(params)    # one-time weight packing (off the call path)

    r_out, outs, h_out = rnn_forward(x, h_state, w_slab)
    jax.block_until_ready((r_out, outs, h_out))

    r_ref, o_ref, h_ref = rnn_reference(x, h_state, params)
    assert jnp.allclose(r_out, r_ref, atol=1e-5, rtol=1e-5)
    assert jnp.allclose(outs, o_ref, atol=1e-5, rtol=1e-5)
    assert jnp.allclose(h_out, h_ref, atol=1e-5, rtol=1e-5)

    print("KERNEL_OK")
</pallas_src>

<mosaic_0001>
module attributes {stable_mosaic.version = 11 : i64} {
  func.func @rnn_kernel(%arg0: memref<2x8x22xf32, #tpu.memory_space<vmem>>, %arg1: memref<2x2x32xf32, #tpu.memory_space<vmem>>, %arg2: memref<128x32xf32, #tpu.memory_space<vmem>>, %arg3: memref<2x256xf32, #tpu.memory_space<vmem>>, %arg4: memref<2x1xf32, #tpu.memory_space<vmem>>, %arg5: memref<2x2x32xf32, #tpu.memory_space<vmem>>) attributes {dimension_semantics = [], scalar_prefetch = 0 : i64, scratch_operands = 0 : i64, tpu.core_type = #tpu.core_type<tc>} {
    %c0 = arith.constant 0 : index
    %c0_0 = arith.constant 0 : index
    %0 = vector.load %arg2[%c0, %c0_0] : memref<128x32xf32, #tpu.memory_space<vmem>>, vector<22x32xf32>
    %c24 = arith.constant 24 : index
    %c0_1 = arith.constant 0 : index
    %1 = vector.load %arg2[%c24, %c0_1] : memref<128x32xf32, #tpu.memory_space<vmem>>, vector<32x32xf32>
    %c56 = arith.constant 56 : index
    %c0_2 = arith.constant 0 : index
    %2 = vector.load %arg2[%c56, %c0_2] : memref<128x32xf32, #tpu.memory_space<vmem>>, vector<64x32xf32>
    %c120 = arith.constant 120 : index
    %c0_3 = arith.constant 0 : index
    %3 = vector.load %arg2[%c120, %c0_3] : memref<128x32xf32, #tpu.memory_space<vmem>>, vector<1x32xf32>
    %c121 = arith.constant 121 : index
    %c0_4 = arith.constant 0 : index
    %4 = vector.load %arg2[%c121, %c0_4] : memref<128x32xf32, #tpu.memory_space<vmem>>, vector<1x32xf32>
    %c122 = arith.constant 122 : index
    %c0_5 = arith.constant 0 : index
    %5 = vector.load %arg2[%c122, %c0_5] : memref<128x32xf32, #tpu.memory_space<vmem>>, vector<1x32xf32>
    %c123 = arith.constant 123 : index
    %c0_6 = arith.constant 0 : index
    %6 = vector.load %arg2[%c123, %c0_6] : memref<128x32xf32, #tpu.memory_space<vmem>>, vector<1x1xf32>
    %c0_7 = arith.constant 0 : index
    %c0_8 = arith.constant 0 : index
    %c0_9 = arith.constant 0 : index
    %7 = vector.load %arg0[%c0_7, %c0_8, %c0_9] : memref<2x8x22xf32, #tpu.memory_space<vmem>>, vector<2x8x22xf32>
    %8 = vector.shape_cast %7 : vector<2x8x22xf32> to vector<16x22xf32>
    %cst = arith.constant dense<0.000000e+00> : vector<16x32xf32>
    %9 = tpu.matmul %8, %0, %cst {dimension_numbers = #tpu.dot_dimension_numbers<[1], [0], [0], [1], [0, 0, 1, 1], [], []>} : vector<16x22xf32>, vector<22x32xf32>, vector<16x32xf32> -> vector<16x32xf32>
    %10 = vector.broadcast %3 : vector<1x32xf32> to vector<16x32xf32>
    %11 = arith.addf %9, %10 : vector<16x32xf32>
    %12 = vector.shape_cast %11 : vector<16x32xf32> to vector<2x8x32xf32>
    %c0_10 = arith.constant 0 : index
    %c0_11 = arith.constant 0 : index
    %c0_12 = arith.constant 0 : index
    %13 = vector.load %arg1[%c0_10, %c0_11, %c0_12] : memref<2x2x32xf32, #tpu.memory_space<vmem>>, vector<1x2x32xf32>
    %14 = vector.shape_cast %13 : vector<1x2x32xf32> to vector<2x32xf32>
    %c1 = arith.constant 1 : index
    %c0_13 = arith.constant 0 : index
    %c0_14 = arith.constant 0 : index
    %15 = vector.load %arg1[%c1, %c0_13, %c0_14] : memref<2x2x32xf32, #tpu.memory_space<vmem>>, vector<1x2x32xf32>
    %16 = vector.shape_cast %15 : vector<1x2x32xf32> to vector<2x32xf32>
    %17 = vector.shape_cast %4 : vector<1x32xf32> to vector<1x32xf32>
    %18 = vector.broadcast %17 : vector<1x32xf32> to vector<2x32xf32>
    %19 = vector.extract_strided_slice %12 {offsets = [0, 0, 0], sizes = [2, 1, 32], strides = [1, 1, 1]} : vector<2x8x32xf32> to vector<2x1x32xf32>
    %20 = vector.shape_cast %19 : vector<2x1x32xf32> to vector<2x32xf32>
    %cst_15 = arith.constant dense<0.000000e+00> : vector<2x32xf32>
    %21 = tpu.matmul %14, %1, %cst_15 {dimension_numbers = #tpu.dot_dimension_numbers<[1], [0], [0], [1], [0, 0, 1, 1], [], []>} : vector<2x32xf32>, vector<32x32xf32>, vector<2x32xf32> -> vector<2x32xf32>
    %22 = arith.addf %20, %21 : vector<2x32xf32>
    %23 = math.tanh %22 : vector<2x32xf32>
    %24 = tpu.concatenate %23, %16 in 1 : vector<2x32xf32>, vector<2x32xf32> -> vector<2x64xf32>
    %cst_16 = arith.constant dense<0.000000e+00> : vector<2x32xf32>
    %25 = tpu.matmul %24, %2, %cst_16 {dimension_numbers = #tpu.dot_dimension_numbers<[1], [0], [0], [1], [0, 0, 1, 1], [], []>} : vector<2x64xf32>, vector<64x32xf32>, vector<2x32xf32> -> vector<2x32xf32>
    %26 = arith.addf %25, %18 : vector<2x32xf32>
    %27 = math.tanh %26 : vector<2x32xf32>
    %28 = vector.extract_strided_slice %12 {offsets = [0, 1, 0], sizes = [2, 1, 32], strides = [1, 1, 1]} : vector<2x8x32xf32> to vector<2x1x32xf32>
    %29 = vector.shape_cast %28 : vector<2x1x32xf32> to vector<2x32xf32>
    %cst_17 = arith.constant dense<0.000000e+00> : vector<2x32xf32>
    %30 = tpu.matmul %23, %1, %cst_17 {dimension_numbers = #tpu.dot_dimension_numbers<[1], [0], [0], [1], [0, 0, 1, 1], [], []>} : vector<2x32xf32>, vector<32x32xf32>, vector<2x32xf32> -> vector<2x32xf32>
    %31 = arith.addf %29, %30 : vector<2x32xf32>
    %32 = math.tanh %31 : vector<2x32xf32>
    %33 = tpu.concatenate %32, %27 in 1 : vector<2x32xf32>, vector<2x32xf32> -> vector<2x64xf32>
    %cst_18 = arith.constant dense<0.000000e+00> : vector<2x32xf32>
    %34 = tpu.matmul %33, %2, %cst_18 {dimension_numbers = #tpu.dot_dimension_numbers<[1], [0], [0], [1], [0, 0, 1, 1], [], []>} : vector<2x64xf32>, vector<64x32xf32>, vector<2x32xf32> -> vector<2x32xf32>
    %35 = arith.addf %34, %18 : vector<2x32xf32>
    %36 = math.tanh %35 : vector<2x32xf32>
    %37 = vector.extract_strided_slice %12 {offsets = [0, 2, 0], sizes = [2, 1, 32], strides = [1, 1, 1]} : vector<2x8x32xf32> to vector<2x1x32xf32>
    %38 = vector.shape_cast %37 : vector<2x1x32xf32> to vector<2x32xf32>
    %cst_19 = arith.constant dense<0.000000e+00> : vector<2x32xf32>
    %39 = tpu.matmul %32, %1, %cst_19 {dimension_numbers = #tpu.dot_dimension_numbers<[1], [0], [0], [1], [0, 0, 1, 1], [], []>} : vector<2x32xf32>, vector<32x32xf32>, vector<2x32xf32> -> vector<2x32xf32>
    %40 = arith.addf %38, %39 : vector<2x32xf32>
    %41 = math.tanh %40 : vector<2x32xf32>
    %42 = tpu.concatenate %41, %36 in 1 : vector<2x32xf32>, vector<2x32xf32> -> vector<2x64xf32>
    %cst_20 = arith.constant dense<0.000000e+00> : vector<2x32xf32>
    %43 = tpu.matmul %42, %2, %cst_20 {dimension_numbers = #tpu.dot_dimension_numbers<[1], [0], [0], [1], [0, 0, 1, 1], [], []>} : vector<2x64xf32>, vector<64x32xf32>, vector<2x32xf32> -> vector<2x32xf32>
    %44 = arith.addf %43, %18 : vector<2x32xf32>
    %45 = math.tanh %44 : vector<2x32xf32>
    %46 = vector.extract_strided_slice %12 {offsets = [0, 3, 0], sizes = [2, 1, 32], strides = [1, 1, 1]} : vector<2x8x32xf32> to vector<2x1x32xf32>
    %47 = vector.shape_cast %46 : vector<2x1x32xf32> to vector<2x32xf32>
    %cst_21 = arith.constant dense<0.000000e+00> : vector<2x32xf32>
    %48 = tpu.matmul %41, %1, %cst_21 {dimension_numbers = #tpu.dot_dimension_numbers<[1], [0], [0], [1], [0, 0, 1, 1], [], []>} : vector<2x32xf32>, vector<32x32xf32>, vector<2x32xf32> -> vector<2x32xf32>
    %49 = arith.addf %47, %48 : vector<2x32xf32>
    %50 = math.tanh %49 : vector<2x32xf32>
    %51 = tpu.concatenate %50, %45 in 1 : vector<2x32xf32>, vector<2x32xf32> -> vector<2x64xf32>
    %cst_22 = arith.constant dense<0.000000e+00> : vector<2x32xf32>
    %52 = tpu.matmul %51, %2, %cst_22 {dimension_numbers = #tpu.dot_dimension_numbers<[1], [0], [0], [1], [0, 0, 1, 1], [], []>} : vector<2x64xf32>, vector<64x32xf32>, vector<2x32xf32> -> vector<2x32xf32>
    %53 = arith.addf %52, %18 : vector<2x32xf32>
    %54 = math.tanh %53 : vector<2x32xf32>
    %55 = vector.extract_strided_slice %12 {offsets = [0, 4, 0], sizes = [2, 1, 32], strides = [1, 1, 1]} : vector<2x8x32xf32> to vector<2x1x32xf32>
    %56 = vector.shape_cast %55 : vector<2x1x32xf32> to vector<2x32xf32>
    %cst_23 = arith.constant dense<0.000000e+00> : vector<2x32xf32>
    %57 = tpu.matmul %50, %1, %cst_23 {dimension_numbers = #tpu.dot_dimension_numbers<[1], [0], [0], [1], [0, 0, 1, 1], [], []>} : vector<2x32xf32>, vector<32x32xf32>, vector<2x32xf32> -> vector<2x32xf32>
    %58 = arith.addf %56, %57 : vector<2x32xf32>
    %59 = math.tanh %58 : vector<2x32xf32>
    %60 = tpu.concatenate %59, %54 in 1 : vector<2x32xf32>, vector<2x32xf32> -> vector<2x64xf32>
    %cst_24 = arith.constant dense<0.000000e+00> : vector<2x32xf32>
    %61 = tpu.matmul %60, %2, %cst_24 {dimension_numbers = #tpu.dot_dimension_numbers<[1], [0], [0], [1], [0, 0, 1, 1], [], []>} : vector<2x64xf32>, vector<64x32xf32>, vector<2x32xf32> -> vector<2x32xf32>
    %62 = arith.addf %61, %18 : vector<2x32xf32>
    %63 = math.tanh %62 : vector<2x32xf32>
    %64 = vector.extract_strided_slice %12 {offsets = [0, 5, 0], sizes = [2, 1, 32], strides = [1, 1, 1]} : vector<2x8x32xf32> to vector<2x1x32xf32>
    %65 = vector.shape_cast %64 : vector<2x1x32xf32> to vector<2x32xf32>
    %cst_25 = arith.constant dense<0.000000e+00> : vector<2x32xf32>
    %66 = tpu.matmul %59, %1, %cst_25 {dimension_numbers = #tpu.dot_dimension_numbers<[1], [0], [0], [1], [0, 0, 1, 1], [], []>} : vector<2x32xf32>, vector<32x32xf32>, vector<2x32xf32> -> vector<2x32xf32>
    %67 = arith.addf %65, %66 : vector<2x32xf32>
    %68 = math.tanh %67 : vector<2x32xf32>
    %69 = tpu.concatenate %68, %63 in 1 : vector<2x32xf32>, vector<2x32xf32> -> vector<2x64xf32>
    %cst_26 = arith.constant dense<0.000000e+00> : vector<2x32xf32>
    %70 = tpu.matmul %69, %2, %cst_26 {dimension_numbers = #tpu.dot_dimension_numbers<[1], [0], [0], [1], [0, 0, 1, 1], [], []>} : vector<2x64xf32>, vector<64x32xf32>, vector<2x32xf32> -> vector<2x32xf32>
    %71 = arith.addf %70, %18 : vector<2x32xf32>
    %72 = math.tanh %71 : vector<2x32xf32>
    %73 = vector.extract_strided_slice %12 {offsets = [0, 6, 0], sizes = [2, 1, 32], strides = [1, 1, 1]} : vector<2x8x32xf32> to vector<2x1x32xf32>
    %74 = vector.shape_cast %73 : vector<2x1x32xf32> to vector<2x32xf32>
    %cst_27 = arith.constant dense<0.000000e+00> : vector<2x32xf32>
    %75 = tpu.matmul %68, %1, %cst_27 {dimension_numbers = #tpu.dot_dimension_numbers<[1], [0], [0], [1], [0, 0, 1, 1], [], []>} : vector<2x32xf32>, vector<32x32xf32>, vector<2x32xf32> -> vector<2x32xf32>
    %76 = arith.addf %74, %75 : vector<2x32xf32>
    %77 = math.tanh %76 : vector<2x32xf32>
    %78 = tpu.concatenate %77, %72 in 1 : vector<2x32xf32>, vector<2x32xf32> -> vector<2x64xf32>
    %cst_28 = arith.constant dense<0.000000e+00> : vector<2x32xf32>
    %79 = tpu.matmul %78, %2, %cst_28 {dimension_numbers = #tpu.dot_dimension_numbers<[1], [0], [0], [1], [0, 0, 1, 1], [], []>} : vector<2x64xf32>, vector<64x32xf32>, vector<2x32xf32> -> vector<2x32xf32>
    %80 = arith.addf %79, %18 : vector<2x32xf32>
    %81 = math.tanh %80 : vector<2x32xf32>
    %82 = vector.extract_strided_slice %12 {offsets = [0, 7, 0], sizes = [2, 1, 32], strides = [1, 1, 1]} : vector<2x8x32xf32> to vector<2x1x32xf32>
    %83 = vector.shape_cast %82 : vector<2x1x32xf32> to vector<2x32xf32>
    %cst_29 = arith.constant dense<0.000000e+00> : vector<2x32xf32>
    %84 = tpu.matmul %77, %1, %cst_29 {dimension_numbers = #tpu.dot_dimension_numbers<[1], [0], [0], [1], [0, 0, 1, 1], [], []>} : vector<2x32xf32>, vector<32x32xf32>, vector<2x32xf32> -> vector<2x32xf32>
    %85 = arith.addf %83, %84 : vector<2x32xf32>
    %86 = math.tanh %85 : vector<2x32xf32>
    %87 = tpu.concatenate %86, %81 in 1 : vector<2x32xf32>, vector<2x32xf32> -> vector<2x64xf32>
    %cst_30 = arith.constant dense<0.000000e+00> : vector<2x32xf32>
    %88 = tpu.matmul %87, %2, %cst_30 {dimension_numbers = #tpu.dot_dimension_numbers<[1], [0], [0], [1], [0, 0, 1, 1], [], []>} : vector<2x64xf32>, vector<64x32xf32>, vector<2x32xf32> -> vector<2x32xf32>
    %89 = arith.addf %88, %18 : vector<2x32xf32>
    %90 = math.tanh %89 : vector<2x32xf32>
    %91 = tpu.concatenate %27, %36, %45, %54, %63, %72, %81, %90 in 1 : vector<2x32xf32>, vector<2x32xf32>, vector<2x32xf32>, vector<2x32xf32>, vector<2x32xf32>, vector<2x32xf32>, vector<2x32xf32>, vector<2x32xf32> -> vector<2x256xf32>
    %c0_31 = arith.constant 0 : index
    %c0_32 = arith.constant 0 : index
    %92 = vector.load %arg3[%c0_31, %c0_32] : memref<2x256xf32, #tpu.memory_space<vmem>>, vector<2x256xf32>
    tpu.vector_store %arg3[%c0_31, %c0_32], %91 {strides = array<i32>} : memref<2x256xf32, #tpu.memory_space<vmem>>, vector<2x256xf32>,
    %c0_33 = arith.constant 0 : index
    %c0_34 = arith.constant 0 : index
    %c0_35 = arith.constant 0 : index
    %93 = vector.load %arg5[%c0_33, %c0_34, %c0_35] : memref<2x2x32xf32, #tpu.memory_space<vmem>>, vector<1x2x32xf32>
    %94 = vector.shape_cast %93 : vector<1x2x32xf32> to vector<2x32xf32>
    %95 = vector.shape_cast %86 : vector<2x32xf32> to vector<1x2x32xf32>
    tpu.vector_store %arg5[%c0_33, %c0_34, %c0_35], %95 {strides = array<i32>} : memref<2x2x32xf32, #tpu.memory_space<vmem>>, vector<1x2x32xf32>,
    %c1_36 = arith.constant 1 : index
    %c0_37 = arith.constant 0 : index
    %c0_38 = arith.constant 0 : index
    %96 = vector.load %arg5[%c1_36, %c0_37, %c0_38] : memref<2x2x32xf32, #tpu.memory_space<vmem>>, vector<1x2x32xf32>
    %97 = vector.shape_cast %96 : vector<1x2x32xf32> to vector<2x32xf32>
    %98 = vector.shape_cast %90 : vector<2x32xf32> to vector<1x2x32xf32>
    tpu.vector_store %arg5[%c1_36, %c0_37, %c0_38], %98 {strides = array<i32>} : memref<2x2x32xf32, #tpu.memory_space<vmem>>, vector<1x2x32xf32>,
    %99 = vector.broadcast %5 : vector<1x32xf32> to vector<2x32xf32>
    %100 = arith.mulf %90, %99 : vector<2x32xf32>
    %cst_39 = arith.constant dense<0.000000e+00> : vector<2xf32>
    %101 = vector.multi_reduction <add>, %100, %cst_39 [1] : vector<2x32xf32> to vector<2xf32>
    %102 = vector.shape_cast %101 : vector<2xf32> to vector<2x1xf32>
    %103 = vector.broadcast %6 : vector<1x1xf32> to vector<2x1xf32>
    %104 = arith.addf %102, %103 : vector<2x1xf32>
    %c0_40 = arith.constant 0 : index
    %c0_41 = arith.constant 0 : index
    %105 = vector.load %arg4[%c0_40, %c0_41] : memref<2x1xf32, #tpu.memory_space<vmem>>, vector<2x1xf32>
    tpu.vector_store %arg4[%c0_40, %c0_41], %104 {strides = array<i32>} : memref<2x1xf32, #tpu.memory_space<vmem>>, vector<2x1xf32>,
    return
  }
}

</mosaic_0001>

<llo_original>
// kernel: rnn_forward.1
$region0: #{rnn_forward.1}
  #allocation0 [shape = 'u32[]', space=smem, size = 0x4, offset = 0x4, fixed_abs, tag = 'smem constant byte address 0x4 - core index']
  #allocation1 [shape = 'u32[144,128]{1,0:T(1,128)}', space=vmem, size = 0x12000, scoped, tag = 'internal scratch']
  %s0 = inlined_call_operand.vmem [shape: f32[2,8,22], index: 0, kind: input, shape index: {}]
  %s1 = inlined_call_operand.vmem [shape: f32[2,2,32], index: 1, kind: input, shape index: {}]
  %s2 = inlined_call_operand.vmem [shape: f32[128,32], index: 2, kind: input, shape index: {}]
  %s3 = inlined_call_operand.vmem [shape: f32[2,256], index: 3, kind: output, shape index: {0}]
  %s4 = inlined_call_operand.vmem [shape: f32[2,1], index: 4, kind: output, shape index: {1}]
  %s5 = inlined_call_operand.hbm [shape: f32[2,2,32], index: 5, kind: output, shape index: {2}]
  %6 = xla_tuple %s3, %s4, %s5
  %s7 = sld [smem:[#allocation0]]
  $region38: #{rnn_forward.1} parent=0
    _
  %s9 = ssub.s32 1, %s7
  %s10 = scalar_select 0, %s9, %s7
  $region1: #{rnn_forward.1} parent=0
    #allocation2 [shape = 'u8[2048]{0}', space=vmem, size = 0x800, scoped, tag = 'output window, operand 2, single buffered']
    #allocation3 [shape = 's32[1]{0}', space=sflag, size = 0x4, scoped, tag = 'scoped memory for rnn_forward.1']
    %11 = vsyncpa [#allocation3], 0
    // Predicated region
    $region2: #{rnn_forward.1} parent=1 // pred_check
      _
    $region3: #{rnn_forward.1} parent=1 // pred_check_branch
      %13 = sbr.rel (0) target = $region5
    $region4: #{rnn_forward.1} parent=1 // pred_region
      _
    $region5: #{rnn_forward.1} parent=1 // pred_fallthru
      _
    // Predicated region
    $region6: #{rnn_forward.1} parent=1 // pred_check
      _
    $region7: #{rnn_forward.1} parent=1 // pred_check_branch
      %15 = sbr.rel (0) target = $region9
    $region8: #{rnn_forward.1} parent=1 // pred_region
      _
    $region9: #{rnn_forward.1} parent=1 // pred_fallthru
      _
    // Predicated region
    $region10: #{rnn_forward.1} parent=1 // pred_check
      _
    $region11: #{rnn_forward.1} parent=1 // pred_check_branch
      %17 = sbr.rel (0) target = $region13
    $region12: #{rnn_forward.1} parent=1 // pred_region
      _
    $region13: #{rnn_forward.1} parent=1 // pred_fallthru
      _
    %v18 = vld [vmem:[%s2] sm:$0xff]
    %v19 = vld [vmem:[%s2 + $0x8] sm:$0xff]
    %v20 = vld [vmem:[%s2 + $0x10] sm:$0x3f]
    %v21 = vld [vmem:[%s2 + $0x18] sm:$0xff]
    %v22 = vld [vmem:[%s2 + $0x20] sm:$0xff]
    %v23 = vld [vmem:[%s2 + $0x28] sm:$0xff]
    %v24 = vld [vmem:[%s2 + $0x30] sm:$0xff]
    %v25 = vld [vmem:[%s2 + $0x38] sm:$0xff]
    %v26 = vld [vmem:[%s2 + $0x40] sm:$0xff]
    %v27 = vld [vmem:[%s2 + $0x48] sm:$0xff]
    %v28 = vld [vmem:[%s2 + $0x50] sm:$0xff]
    %v29 = vld [vmem:[%s2 + $0x58] sm:$0xff]
    %v30 = vld [vmem:[%s2 + $0x60] sm:$0xff]
    %v31 = vld [vmem:[%s2 + $0x68] sm:$0xff]
    %v32 = vld [vmem:[%s2 + $0x70] sm:$0xff]
    %v33 = vld [vmem:[%s2 + $0x78] sm:$0x1]
    %v34 = vld [vmem:[%s2 + $0x79] sm:$0x1]
    %v35 = vld [vmem:[%s2 + $0x7a] sm:$0x1]
    %v36 = vld [vmem:[%s2 + $0x7b] sm:$0x1]
    %v37 = vld [vmem:[%s0] sm:$0xff]
    %v38 = vld [vmem:[%s0 + $0x8] sm:$0xff]
    %v39 = vlaneseq
    %v40 = vshrl.u32 %v39, 7
    %v41 = vsub.s32 0, %v40
    %v42 = vrot.slane %v33, %v41
    %vm43 = vcmask 179200
    %v45 = vsel %vm43, %v37, 0
    %v48 = vsel %vm43, %v38, 0
    %vm50 = vcmask 1045504
    %v52 = vsel %vm50, %v20, 0
    %54 = vmatprep.subr.mxu0 0.0
    %55 = vmatpush1.msra.mxu0 %v18
    %56 = vmatprep.subr.mxu0 0.0
    %57 = vmatpush1.msra.mxu0 %v19
    %58 = vmatprep.subr.mxu0 0.0
    %59 = vmatpush1.msra.mxu0 %v52
    %60 = vmatprep.subr.mxu0 0.0
    %61 = vmatpush1.msra.mxu0 0.0
    %62 = vmatprep.subr.mxu0 0.0
    %63 = vmatpush1.msra.mxu0 0.0
    %64 = vmatprep.subr.mxu0 0.0
    %65 = vmatpush1.msra.mxu0 0.0
    %66 = vmatprep.subr.mxu0 0.0
    %67 = vmatpush1.msra.mxu0 0.0
    %68 = vmatprep.subr.mxu0 0.0
    %69 = vmatpush1.msra.mxu0 0.0
    %70 = vmatprep.subr.mxu0 0.0
    %71 = vmatpush1.msra.mxu0 0.0
    %72 = vmatprep.subr.mxu0 0.0
    %73 = vmatpush1.msra.mxu0 0.0
    %74 = vmatprep.subr.mxu0 0.0
    %75 = vmatpush1.msra.mxu0 0.0
    %76 = vmatprep.subr.mxu0 0.0
    %77 = vmatpush1.msra.mxu0 0.0
    %78 = vmatprep.subr.mxu0 0.0
    %79 = vmatpush1.msra.mxu0 0.0
    %80 = vmatprep.subr.mxu0 0.0
    %81 = vmatpush1.msra.mxu0 0.0
    %82 = vmatprep.subr.mxu0 0.0
    %83 = vmatpush1.msra.mxu0 0.0
    %84 = vmatprep.subr.mxu0 0.0
    %85 = vmatpush1.msra.mxu0 0.0
    %86 = vmatprep.subr.mxu0 0.0
    %87 = vmatpush1.msra.mxu0 0.0
    %88 = vmatprep.subr.mxu0 0.0
    %89 = vmatpush1.msra.mxu0 0.0
    %90 = vmatprep.subr.mxu0 0.0
    %91 = vmatpush1.msra.mxu0 0.0
    %92 = vmatprep.subr.mxu0 0.0
    %93 = vmatpush1.msra.mxu0 0.0
    %94 = vmatprep.subr.mxu0 0.0
    %95 = vmatpush1.msra.mxu0 0.0
    %96 = vmatprep.subr.mxu0 0.0
    %97 = vmatpush1.msra.mxu0 0.0
    %98 = vmatprep.subr.mxu0 0.0
    %99 = vmatpush1.msra.mxu0 0.0
    %100 = vmatprep.subr.mxu0 0.0
    %101 = vmatpush1.msra.mxu0 0.0
    %102 = vmatprep.subr.mxu0 0.0
    %103 = vmatpush1.msra.mxu0 0.0
    %104 = vmatprep.subr.mxu0 0.0
    %105 = vmatpush1.msra.mxu0 0.0
    %106 = vmatprep.subr.mxu0 0.0
    %107 = vmatpush1.msra.mxu0 0.0
    %108 = vmatprep.subr.mxu0 0.0
    %109 = vmatpush1.msra.mxu0 0.0
    %110 = vmatprep.subr.mxu0 0.0
    %111 = vmatpush1.msra.mxu0 0.0
    %112 = vmatprep.subr.mxu0 0.0
    %113 = vmatpush1.msra.mxu0 0.0
    %114 = vmatprep.subr.mxu0 0.0
    %115 = vmatpush1.msra.mxu0 0.0
    %116 = vmatprep.subr.mxu0 0.0
    %117 = vmatpush1.msra.mxu0 0.0
    %118 = vmatprep.mubr.f32.mxu0 0.0
    %119 = vmatmul.mubr.f32.gmra.mrb[0].mxu0 %v45
    %v120 = vpop.f32.mrb[0].mxu0
    %v121 = vadd.f32 %v42, %v120
    %v122 = vpop.f32.mrb[0].mxu0
    %123 = vmatprep.mubr.f32.mxu0 0.0
    %124 = vmatmul.mubr.f32.gmra.mrb[0].mxu0 %v48
    %v125 = vpop.f32.mrb[0].mxu0
    %v126 = vadd.f32 %v42, %v125
    %v127 = vpop.f32.mrb[0].mxu0
    %128 = vdwg.mxu0
    %v129 = vld [vmem:[%s1] sm:$0x3]
    %s130 = scalar_lea.vmem %s1, 2
    %v131 = vld [vmem:[%s130] sm:$0x3]
    %v132 = vlaneseq
    %v133 = vshrl.u32 %v132, 7
    %v134 = vsub.s32 0, %v133
    %v135 = vrot.slane %v34, %v134
    %vm136 = vcmask 261120
    %v138 = vsel %vm136, %v129, 0
    %140 = vmatprep.subr.mxu0 0.0
    %141 = vmatpush1.msra.mxu0 %v21
    %142 = vmatprep.subr.mxu0 0.0
    %143 = vmatpush1.msra.mxu0 %v22
    %144 = vmatprep.subr.mxu0 0.0
    %145 = vmatpush1.msra.mxu0 %v23
    %146 = vmatprep.subr.mxu0 0.0
    %147 = vmatpush1.msra.mxu0 %v24
    %148 = vmatprep.subr.mxu0 0.0
    %149 = vmatpush1.msra.mxu0 0.0
    %150 = vmatprep.subr.mxu0 0.0
    %151 = vmatpush1.msra.mxu0 0.0
    %152 = vmatprep.subr.mxu0 0.0
    %153 = vmatpush1.msra.mxu0 0.0
    %154 = vmatprep.subr.mxu0 0.0
    %155 = vmatpush1.msra.mxu0 0.0
    %156 = vmatprep.subr.mxu0 0.0
    %157 = vmatpush1.msra.mxu0 0.0
    %158 = vmatprep.subr.mxu0 0.0
    %159 = vmatpush1.msra.mxu0 0.0
    %160 = vmatprep.subr.mxu0 0.0
    %161 = vmatpush1.msra.mxu0 0.0
    %162 = vmatprep.subr.mxu0 0.0
    %163 = vmatpush1.msra.mxu0 0.0
    %164 = vmatprep.subr.mxu0 0.0
    %165 = vmatpush1.msra.mxu0 0.0
    %166 = vmatprep.subr.mxu0 0.0
    %167 = vmatpush1.msra.mxu0 0.0
    %168 = vmatprep.subr.mxu0 0.0
    %169 = vmatpush1.msra.mxu0 0.0
    %170 = vmatprep.subr.mxu0 0.0
    %171 = vmatpush1.msra.mxu0 0.0
    %172 = vmatprep.subr.mxu0 0.0
    %173 = vmatpush1.msra.mxu0 0.0
    %174 = vmatprep.subr.mxu0 0.0
    %175 = vmatpush1.msra.mxu0 0.0
    %176 = vmatprep.subr.mxu0 0.0
    %177 = vmatpush1.msra.mxu0 0.0
    %178 = vmatprep.subr.mxu0 0.0
    %179 = vmatpush1.msra.mxu0 0.0
    %180 = vmatprep.subr.mxu0 0.0
    %181 = vmatpush1.msra.mxu0 0.0
    %182 = vmatprep.subr.mxu0 0.0
    %183 = vmatpush1.msra.mxu0 0.0
    %184 = vmatprep.subr.mxu0 0.0
    %185 = vmatpush1.msra.mxu0 0.0
    %186 = vmatprep.subr.mxu0 0.0
    %187 = vmatpush1.msra.mxu0 0.0
    %188 = vmatprep.subr.mxu0 0.0
    %189 = vmatpush1.msra.mxu0 0.0
    %190 = vmatprep.subr.mxu0 0.0
    %191 = vmatpush1.msra.mxu0 0.0
    %192 = vmatprep.subr.mxu0 0.0
    %193 = vmatpush1.msra.mxu0 0.0
    %194 = vmatprep.subr.mxu0 0.0
    %195 = vmatpush1.msra.mxu0 0.0
    %196 = vmatprep.subr.mxu0 0.0
    %197 = vmatpush1.msra.mxu0 0.0
    %198 = vmatprep.subr.mxu0 0.0
    %199 = vmatpush1.msra.mxu0 0.0
    %200 = vmatprep.subr.mxu0 0.0
    %201 = vmatpush1.msra.mxu0 0.0
    %202 = vmatprep.subr.mxu0 0.0
    %203 = vmatpush1.msra.mxu0 0.0
    %204 = vmatprep.mubr.f32.mxu0 0.0
    %205 = vmatmul.mubr.f32.gmra.mrb[0].mxu0 %v138
    %v206 = vpop.f32.mrb[0].mxu0
    %v207 = vadd.f32 0.0, %v206
    %v208 = vpop.f32.mrb[0].mxu0
    %209 = vdwg.mxu0
    %v211 = vrot.slane %v207, 1
    %v214 = vadd.f32 %v121, %v207
    %v215 = vadd.f32 %v126, %v211
    %v216 = vtanh.pop %v214
    %v217 = vtanh.pop %v215
    %v220 = vrot.slane %v217, 7
    %vm221 = vcmask 1041409
    %v222 = vsel %vm221, %v220, %v216
    %225 = vrot.lane.b32.xlu0 %v131, 32
    %v226 = vpop.permute.xlu0 %225
    %v228 = vsel %vm136, %v222, %v226
    %vm229 = vcmask 523264
    %v231 = vsel %vm229, %v228, 0
    %233 = vmatprep.subr.mxu0 0.0
    %234 = vmatpush1.msra.mxu0 %v25
    %235 = vmatprep.subr.mxu0 0.0
    %236 = vmatpush1.msra.mxu0 %v26
    %237 = vmatprep.subr.mxu0 0.0
    %238 = vmatpush1.msra.mxu0 %v27
    %239 = vmatprep.subr.mxu0 0.0
    %240 = vmatpush1.msra.mxu0 %v28
    %241 = vmatprep.subr.mxu0 0.0
    %242 = vmatpush1.msra.mxu0 %v29
    %243 = vmatprep.subr.mxu0 0.0
    %244 = vmatpush1.msra.mxu0 %v30
    %245 = vmatprep.subr.mxu0 0.0
    %246 = vmatpush1.msra.mxu0 %v31
    %247 = vmatprep.subr.mxu0 0.0
    %248 = vmatpush1.msra.mxu0 %v32
    %249 = vmatprep.subr.mxu0 0.0
    %250 = vmatpush1.msra.mxu0 0.0
    %251 = vmatprep.subr.mxu0 0.0
    %252 = vmatpush1.msra.mxu0 0.0
    %253 = vmatprep.subr.mxu0 0.0
    %254 = vmatpush1.msra.mxu0 0.0
    %255 = vmatprep.subr.mxu0 0.0
    %256 = vmatpush1.msra.mxu0 0.0
    %257 = vmatprep.subr.mxu0 0.0
    %258 = vmatpush1.msra.mxu0 0.0
    %259 = vmatprep.subr.mxu0 0.0
    %260 = vmatpush1.msra.mxu0 0.0
    %261 = vmatprep.subr.mxu0 0.0
    %262 = vmatpush1.msra.mxu0 0.0
    %263 = vmatprep.subr.mxu0 0.0
    %264 = vmatpush1.msra.mxu0 0.0
    %265 = vmatprep.subr.mxu0 0.0
    %266 = vmatpush1.msra.mxu0 0.0
    %267 = vmatprep.subr.mxu0 0.0
    %268 = vmatpush1.msra.mxu0 0.0
    %269 = vmatprep.subr.mxu0 0.0
    %270 = vmatpush1.msra.mxu0 0.0
    %271 = vmatprep.subr.mxu0 0.0
    %272 = vmatpush1.msra.mxu0 0.0
    %273 = vmatprep.subr.mxu0 0.0
    %274 = vmatpush1.msra.mxu0 0.0
    %275 = vmatprep.subr.mxu0 0.0
    %276 = vmatpush1.msra.mxu0 0.0
    %277 = vmatprep.subr.mxu0 0.0
    %278 = vmatpush1.msra.mxu0 0.0
    %279 = vmatprep.subr.mxu0 0.0
    %280 = vmatpush1.msra.mxu0 0.0
    %281 = vmatprep.subr.mxu0 0.0
    %282 = vmatpush1.msra.mxu0 0.0
    %283 = vmatprep.subr.mxu0 0.0
    %284 = vmatpush1.msra.mxu0 0.0
    %285 = vmatprep.subr.mxu0 0.0
    %286 = vmatpush1.msra.mxu0 0.0
    %287 = vmatprep.subr.mxu0 0.0
    %288 = vmatpush1.msra.mxu0 0.0
    %289 = vmatprep.subr.mxu0 0.0
    %290 = vmatpush1.msra.mxu0 0.0
    %291 = vmatprep.subr.mxu0 0.0
    %292 = vmatpush1.msra.mxu0 0.0
    %293 = vmatprep.subr.mxu0 0.0
    %294 = vmatpush1.msra.mxu0 0.0
    %295 = vmatprep.subr.mxu0 0.0
    %296 = vmatpush1.msra.mxu0 0.0
    %297 = vmatprep.mubr.f32.mxu0 0.0
    %298 = vmatmul.mubr.f32.gmra.mrb[0].mxu0 %v231
    %v299 = vpop.f32.mrb[0].mxu0
    %v300 = vadd.f32 %v135, %v299
    %v301 = vpop.f32.mrb[0].mxu0
    %302 = vdwg.mxu0
    %v303 = vtanh.pop %v300
    %v304 = vsel %vm136, %v222, 0
    %306 = vmatprep.subr.mxu0 0.0
    %307 = vmatpush1.msra.mxu0 %v21
    %308 = vmatprep.subr.mxu0 0.0
    %309 = vmatpush1.msra.mxu0 %v22
    %310 = vmatprep.subr.mxu0 0.0
    %311 = vmatpush1.msra.mxu0 %v23
    %312 = vmatprep.subr.mxu0 0.0
    %313 = vmatpush1.msra.mxu0 %v24
    %314 = vmatprep.subr.mxu0 0.0
    %315 = vmatpush1.msra.mxu0 0.0
    %316 = vmatprep.subr.mxu0 0.0
    %317 = vmatpush1.msra.mxu0 0.0
    %318 = vmatprep.subr.mxu0 0.0
    %319 = vmatpush1.msra.mxu0 0.0
    %320 = vmatprep.subr.mxu0 0.0
    %321 = vmatpush1.msra.mxu0 0.0
    %322 = vmatprep.subr.mxu0 0.0
    %323 = vmatpush1.msra.mxu0 0.0
    %324 = vmatprep.subr.mxu0 0.0
    %325 = vmatpush1.msra.mxu0 0.0
    %326 = vmatprep.subr.mxu0 0.0
    %327 = vmatpush1.msra.mxu0 0.0
    %328 = vmatprep.subr.mxu0 0.0
    %329 = vmatpush1.msra.mxu0 0.0
    %330 = vmatprep.subr.mxu0 0.0
    %331 = vmatpush1.msra.mxu0 0.0
    %332 = vmatprep.subr.mxu0 0.0
    %333 = vmatpush1.msra.mxu0 0.0
    %334 = vmatprep.subr.mxu0 0.0
    %335 = vmatpush1.msra.mxu0 0.0
    %336 = vmatprep.subr.mxu0 0.0
    %337 = vmatpush1.msra.mxu0 0.0
    %338 = vmatprep.subr.mxu0 0.0
    %339 = vmatpush1.msra.mxu0 0.0
    %340 = vmatprep.subr.mxu0 0.0
    %341 = vmatpush1.msra.mxu0 0.0
    %342 = vmatprep.subr.mxu0 0.0
    %343 = vmatpush1.msra.mxu0 0.0
    %344 = vmatprep.subr.mxu0 0.0
    %345 = vmatpush1.msra.mxu0 0.0
    %346 = vmatprep.subr.mxu0 0.0
    %347 = vmatpush1.msra.mxu0 0.0
    %348 = vmatprep.subr.mxu0 0.0
    %349 = vmatpush1.msra.mxu0 0.0
    %350 = vmatprep.subr.mxu0 0.0
    %351 = vmatpush1.msra.mxu0 0.0
    %352 = vmatprep.subr.mxu0 0.0
    %353 = vmatpush1.msra.mxu0 0.0
    %354 = vmatprep.subr.mxu0 0.0
    %355 = vmatpush1.msra.mxu0 0.0
    %356 = vmatprep.subr.mxu0 0.0
    %357 = vmatpush1.msra.mxu0 0.0
    %358 = vmatprep.subr.mxu0 0.0
    %359 = vmatpush1.msra.mxu0 0.0
    %360 = vmatprep.subr.mxu0 0.0
    %361 = vmatpush1.msra.mxu0 0.0
    %362 = vmatprep.subr.mxu0 0.0
    %363 = vmatpush1.msra.mxu0 0.0
    %364 = vmatprep.subr.mxu0 0.0
    %365 = vmatpush1.msra.mxu0 0.0
    %366 = vmatprep.subr.mxu0 0.0
    %367 = vmatpush1.msra.mxu0 0.0
    %368 = vmatprep.subr.mxu0 0.0
    %369 = vmatpush1.msra.mxu0 0.0
    %370 = vmatprep.mubr.f32.mxu0 0.0
    %371 = vmatmul.mubr.f32.gmra.mrb[0].mxu0 %v304
    %v372 = vpop.f32.mrb[0].mxu0
    %v373 = vadd.f32 0.0, %v372
    %v374 = vpop.f32.mrb[0].mxu0
    %375 = vdwg.mxu0
    %v377 = vrot.slane %v373, 7
    %v380 = vadd.f32 %v121, %v377
    %v381 = vadd.f32 %v126, %v373
    %v382 = vtanh.pop %v380
    %v383 = vtanh.pop %v381
    %v386 = vrot.slane %v383, 7
    %vm387 = vcmask 1042434
    %v388 = vsel %vm387, %v386, %v382
    %v391 = vrot.slane %v303, 7
    %392 = vrot.lane.b32.xlu0 %v391, 32
    %v393 = vpop.permute.xlu0 %392
    %v395 = vsel %vm136, %v388, %v393
    %v397 = vrot.slane %v395, 1
    %v398 = vsel %vm229, %v397, 0
    %400 = vmatprep.subr.mxu0 0.0
    %401 = vmatpush1.msra.mxu0 %v25
    %402 = vmatprep.subr.mxu0 0.0
    %403 = vmatpush1.msra.mxu0 %v26
    %404 = vmatprep.subr.mxu0 0.0
    %405 = vmatpush1.msra.mxu0 %v27
    %406 = vmatprep.subr.mxu0 0.0
    %407 = vmatpush1.msra.mxu0 %v28
    %408 = vmatprep.subr.mxu0 0.0
    %409 = vmatpush1.msra.mxu0 %v29
    %410 = vmatprep.subr.mxu0 0.0
    %411 = vmatpush1.msra.mxu0 %v30
    %412 = vmatprep.subr.mxu0 0.0
    %413 = vmatpush1.msra.mxu0 %v31
    %414 = vmatprep.subr.mxu0 0.0
    %415 = vmatpush1.msra.mxu0 %v32
    %416 = vmatprep.subr.mxu0 0.0
    %417 = vmatpush1.msra.mxu0 0.0
    %418 = vmatprep.subr.mxu0 0.0
    %419 = vmatpush1.msra.mxu0 0.0
    %420 = vmatprep.subr.mxu0 0.0
    %421 = vmatpush1.msra.mxu0 0.0
    %422 = vmatprep.subr.mxu0 0.0
    %423 = vmatpush1.msra.mxu0 0.0
    %424 = vmatprep.subr.mxu0 0.0
    %425 = vmatpush1.msra.mxu0 0.0
    %426 = vmatprep.subr.mxu0 0.0
    %427 = vmatpush1.msra.mxu0 0.0
    %428 = vmatprep.subr.mxu0 0.0
    %429 = vmatpush1.msra.mxu0 0.0
    %430 = vmatprep.subr.mxu0 0.0
    %431 = vmatpush1.msra.mxu0 0.0
    %432 = vmatprep.subr.mxu0 0.0
    %433 = vmatpush1.msra.mxu0 0.0
    %434 = vmatprep.subr.mxu0 0.0
    %435 = vmatpush1.msra.mxu0 0.0
    %436 = vmatprep.subr.mxu0 0.0
    %437 = vmatpush1.msra.mxu0 0.0
    %438 = vmatprep.subr.mxu0 0.0
    %439 = vmatpush1.msra.mxu0 0.0
    %440 = vmatprep.subr.mxu0 0.0
    %441 = vmatpush1.msra.mxu0 0.0
    %442 = vmatprep.subr.mxu0 0.0
    %443 = vmatpush1.msra.mxu0 0.0
    %444 = vmatprep.subr.mxu0 0.0
    %445 = vmatpush1.msra.mxu0 0.0
    %446 = vmatprep.subr.mxu0 0.0
    %447 = vmatpush1.msra.mxu0 0.0
    %448 = vmatprep.subr.mxu0 0.0
    %449 = vmatpush1.msra.mxu0 0.0
    %450 = vmatprep.subr.mxu0 0.0
    %451 = vmatpush1.msra.mxu0 0.0
    %452 = vmatprep.subr.mxu0 0.0
    %453 = vmatpush1.msra.mxu0 0.0
    %454 = vmatprep.subr.mxu0 0.0
    %455 = vmatpush1.msra.mxu0 0.0
    %456 = vmatprep.subr.mxu0 0.0
    %457 = vmatpush1.msra.mxu0 0.0
    %458 = vmatprep.subr.mxu0 0.0
    %459 = vmatpush1.msra.mxu0 0.0
    %460 = vmatprep.subr.mxu0 0.0
    %461 = vmatpush1.msra.mxu0 0.0
    %462 = vmatprep.subr.mxu0 0.0
    %463 = vmatpush1.msra.mxu0 0.0
    %464 = vmatprep.mubr.f32.mxu0 0.0
    %465 = vmatmul.mubr.f32.gmra.mrb[0].mxu0 %v398
    %v466 = vpop.f32.mrb[0].mxu0
    %v467 = vadd.f32 %v135, %v466
    %v468 = vpop.f32.mrb[0].mxu0
    %469 = vdwg.mxu0
    %v470 = vtanh.pop %v467
    %v471 = vrot.slane %v382, 1
    %v472 = vsel %vm221, %v383, %v471
    %v473 = vsel %vm136, %v472, 0
    %475 = vmatprep.subr.mxu0 0.0
    %476 = vmatpush1.msra.mxu0 %v21
    %477 = vmatprep.subr.mxu0 0.0
    %478 = vmatpush1.msra.mxu0 %v22
    %479 = vmatprep.subr.mxu0 0.0
    %480 = vmatpush1.msra.mxu0 %v23
    %481 = vmatprep.subr.mxu0 0.0
    %482 = vmatpush1.msra.mxu0 %v24
    %483 = vmatprep.subr.mxu0 0.0
    %484 = vmatpush1.msra.mxu0 0.0
    %485 = vmatprep.subr.mxu0 0.0
    %486 = vmatpush1.msra.mxu0 0.0
    %487 = vmatprep.subr.mxu0 0.0
    %488 = vmatpush1.msra.mxu0 0.0
    %489 = vmatprep.subr.mxu0 0.0
    %490 = vmatpush1.msra.mxu0 0.0
    %491 = vmatprep.subr.mxu0 0.0
    %492 = vmatpush1.msra.mxu0 0.0
    %493 = vmatprep.subr.mxu0 0.0
    %494 = vmatpush1.msra.mxu0 0.0
    %495 = vmatprep.subr.mxu0 0.0
    %496 = vmatpush1.msra.mxu0 0.0
    %497 = vmatprep.subr.mxu0 0.0
    %498 = vmatpush1.msra.mxu0 0.0
    %499 = vmatprep.subr.mxu0 0.0
    %500 = vmatpush1.msra.mxu0 0.0
    %501 = vmatprep.subr.mxu0 0.0
    %502 = vmatpush1.msra.mxu0 0.0
    %503 = vmatprep.subr.mxu0 0.0
    %504 = vmatpush1.msra.mxu0 0.0
    %505 = vmatprep.subr.mxu0 0.0
    %506 = vmatpush1.msra.mxu0 0.0
    %507 = vmatprep.subr.mxu0 0.0
    %508 = vmatpush1.msra.mxu0 0.0
    %509 = vmatprep.subr.mxu0 0.0
    %510 = vmatpush1.msra.mxu0 0.0
    %511 = vmatprep.subr.mxu0 0.0
    %512 = vmatpush1.msra.mxu0 0.0
    %513 = vmatprep.subr.mxu0 0.0
    %514 = vmatpush1.msra.mxu0 0.0
    %515 = vmatprep.subr.mxu0 0.0
    %516 = vmatpush1.msra.mxu0 0.0
    %517 = vmatprep.subr.mxu0 0.0
    %518 = vmatpush1.msra.mxu0 0.0
    %519 = vmatprep.subr.mxu0 0.0
    %520 = vmatpush1.msra.mxu0 0.0
    %521 = vmatprep.subr.mxu0 0.0
    %522 = vmatpush1.msra.mxu0 0.0
    %523 = vmatprep.subr.mxu0 0.0
    %524 = vmatpush1.msra.mxu0 0.0
    %525 = vmatprep.subr.mxu0 0.0
    %526 = vmatpush1.msra.mxu0 0.0
    %527 = vmatprep.subr.mxu0 0.0
    %528 = vmatpush1.msra.mxu0 0.0
    %529 = vmatprep.subr.mxu0 0.0
    %530 = vmatpush1.msra.mxu0 0.0
    %531 = vmatprep.subr.mxu0 0.0
    %532 = vmatpush1.msra.mxu0 0.0
    %533 = vmatprep.subr.mxu0 0.0
    %534 = vmatpush1.msra.mxu0 0.0
    %535 = vmatprep.subr.mxu0 0.0
    %536 = vmatpush1.msra.mxu0 0.0
    %537 = vmatprep.subr.mxu0 0.0
    %538 = vmatpush1.msra.mxu0 0.0
    %539 = vmatprep.mubr.f32.mxu0 0.0
    %540 = vmatmul.mubr.f32.gmra.mrb[0].mxu0 %v473
    %v541 = vpop.f32.mrb[0].mxu0
    %v542 = vadd.f32 0.0, %v541
    %v543 = vpop.f32.mrb[0].mxu0
    %544 = vdwg.mxu0
    %v546 = vrot.slane %v542, 6
    %v547 = vrot.slane %v542, 7
    %v550 = vadd.f32 %v121, %v546
    %v551 = vadd.f32 %v126, %v547
    %v552 = vtanh.pop %v550
    %v553 = vtanh.pop %v551
    %v556 = vrot.slane %v553, 7
    %vm557 = vcmask 1043459
    %v558 = vsel %vm557, %v556, %v552
    %v561 = vrot.slane %v470, 6
    %562 = vrot.lane.b32.xlu0 %v561, 32
    %v563 = vpop.permute.xlu0 %562
    %v565 = vsel %vm136, %v558, %v563
    %v567 = vrot.slane %v565, 2
    %v568 = vsel %vm229, %v567, 0
    %570 = vmatprep.subr.mxu0 0.0
    %571 = vmatpush1.msra.mxu0 %v25
    %572 = vmatprep.subr.mxu0 0.0
    %573 = vmatpush1.msra.mxu0 %v26
    %574 = vmatprep.subr.mxu0 0.0
    %575 = vmatpush1.msra.mxu0 %v27
    %576 = vmatprep.subr.mxu0 0.0
    %577 = vmatpush1.msra.mxu0 %v28
    %578 = vmatprep.subr.mxu0 0.0
    %579 = vmatpush1.msra.mxu0 %v29
    %580 = vmatprep.subr.mxu0 0.0
    %581 = vmatpush1.msra.mxu0 %v30
    %582 = vmatprep.subr.mxu0 0.0
    %583 = vmatpush1.msra.mxu0 %v31
    %584 = vmatprep.subr.mxu0 0.0
    %585 = vmatpush1.msra.mxu0 %v32
    %586 = vmatprep.subr.mxu0 0.0
    %587 = vmatpush1.msra.mxu0 0.0
    %588 = vmatprep.subr.mxu0 0.0
    %589 = vmatpush1.msra.mxu0 0.0
    %590 = vmatprep.subr.mxu0 0.0
    %591 = vmatpush1.msra.mxu0 0.0
    %592 = vmatprep.subr.mxu0 0.0
    %593 = vmatpush1.msra.mxu0 0.0
    %594 = vmatprep.subr.mxu0 0.0
    %595 = vmatpush1.msra.mxu0 0.0
    %596 = vmatprep.subr.mxu0 0.0
    %597 = vmatpush1.msra.mxu0 0.0
    %598 = vmatprep.subr.mxu0 0.0
    %599 = vmatpush1.msra.mxu0 0.0
    %600 = vmatprep.subr.mxu0 0.0
    %601 = vmatpush1.msra.mxu0 0.0
    %602 = vmatprep.subr.mxu0 0.0
    %603 = vmatpush1.msra.mxu0 0.0
    %604 = vmatprep.subr.mxu0 0.0
    %605 = vmatpush1.msra.mxu0 0.0
    %606 = vmatprep.subr.mxu0 0.0
    %607 = vmatpush1.msra.mxu0 0.0
    %608 = vmatprep.subr.mxu0 0.0
    %609 = vmatpush1.msra.mxu0 0.0
    %610 = vmatprep.subr.mxu0 0.0
    %611 = vmatpush1.msra.mxu0 0.0
    %612 = vmatprep.subr.mxu0 0.0
    %613 = vmatpush1.msra.mxu0 0.0
    %614 = vmatprep.subr.mxu0 0.0
    %615 = vmatpush1.msra.mxu0 0.0
    %616 = vmatprep.subr.mxu0 0.0
    %617 = vmatpush1.msra.mxu0 0.0
    %618 = vmatprep.subr.mxu0 0.0
    %619 = vmatpush1.msra.mxu0 0.0
    %620 = vmatprep.subr.mxu0 0.0
    %621 = vmatpush1.msra.mxu0 0.0
    %622 = vmatprep.subr.mxu0 0.0
    %623 = vmatpush1.msra.mxu0 0.0
    %624 = vmatprep.subr.mxu0 0.0
    %625 = vmatpush1.msra.mxu0 0.0
    %626 = vmatprep.subr.mxu0 0.0
    %627 = vmatpush1.msra.mxu0 0.0
    %628 = vmatprep.subr.mxu0 0.0
    %629 = vmatpush1.msra.mxu0 0.0
    %630 = vmatprep.subr.mxu0 0.0
    %631 = vmatpush1.msra.mxu0 0.0
    %632 = vmatprep.subr.mxu0 0.0
    %633 = vmatpush1.msra.mxu0 0.0
    %634 = vmatprep.mubr.f32.mxu0 0.0
    %635 = vmatmul.mubr.f32.gmra.mrb[0].mxu0 %v568
    %v636 = vpop.f32.mrb[0].mxu0
    %v637 = vadd.f32 %v135, %v636
    %v638 = vpop.f32.mrb[0].mxu0
    %639 = vdwg.mxu0
    %v640 = vtanh.pop %v637
    %v641 = vrot.slane %v552, 2
    %v642 = vrot.slane %v553, 1
    %v643 = vsel %vm221, %v642, %v641
    %v644 = vsel %vm136, %v643, 0
    %646 = vmatprep.subr.mxu0 0.0
    %647 = vmatpush1.msra.mxu0 %v21
    %648 = vmatprep.subr.mxu0 0.0
    %649 = vmatpush1.msra.mxu0 %v22
    %650 = vmatprep.subr.mxu0 0.0
    %651 = vmatpush1.msra.mxu0 %v23
    %652 = vmatprep.subr.mxu0 0.0
    %653 = vmatpush1.msra.mxu0 %v24
    %654 = vmatprep.subr.mxu0 0.0
    %655 = vmatpush1.msra.mxu0 0.0
    %656 = vmatprep.subr.mxu0 0.0
    %657 = vmatpush1.msra.mxu0 0.0
    %658 = vmatprep.subr.mxu0 0.0
    %659 = vmatpush1.msra.mxu0 0.0
    %660 = vmatprep.subr.mxu0 0.0
    %661 = vmatpush1.msra.mxu0 0.0
    %662 = vmatprep.subr.mxu0 0.0
    %663 = vmatpush1.msra.mxu0 0.0
    %664 = vmatprep.subr.mxu0 0.0
    %665 = vmatpush1.msra.mxu0 0.0
    %666 = vmatprep.subr.mxu0 0.0
    %667 = vmatpush1.msra.mxu0 0.0
    %668 = vmatprep.subr.mxu0 0.0
    %669 = vmatpush1.msra.mxu0 0.0
    %670 = vmatprep.subr.mxu0 0.0
    %671 = vmatpush1.msra.mxu0 0.0
    %672 = vmatprep.subr.mxu0 0.0
    %673 = vmatpush1.msra.mxu0 0.0
    %674 = vmatprep.subr.mxu0 0.0
    %675 = vmatpush1.msra.mxu0 0.0
    %676 = vmatprep.subr.mxu0 0.0
    %677 = vmatpush1.msra.mxu0 0.0
    %678 = vmatprep.subr.mxu0 0.0
    %679 = vmatpush1.msra.mxu0 0.0
    %680 = vmatprep.subr.mxu0 0.0
    %681 = vmatpush1.msra.mxu0 0.0
    %682 = vmatprep.subr.mxu0 0.0
    %683 = vmatpush1.msra.mxu0 0.0
    %684 = vmatprep.subr.mxu0 0.0
    %685 = vmatpush1.msra.mxu0 0.0
    %686 = vmatprep.subr.mxu0 0.0
    %687 = vmatpush1.msra.mxu0 0.0
    %688 = vmatprep.subr.mxu0 0.0
    %689 = vmatpush1.msra.mxu0 0.0
    %690 = vmatprep.subr.mxu0 0.0
    %691 = vmatpush1.msra.mxu0 0.0
    %692 = vmatprep.subr.mxu0 0.0
    %693 = vmatpush1.msra.mxu0 0.0
    %694 = vmatprep.subr.mxu0 0.0
    %695 = vmatpush1.msra.mxu0 0.0
    %696 = vmatprep.subr.mxu0 0.0
    %697 = vmatpush1.msra.mxu0 0.0
    %698 = vmatprep.subr.mxu0 0.0
    %699 = vmatpush1.msra.mxu0 0.0
    %700 = vmatprep.subr.mxu0 0.0
    %701 = vmatpush1.msra.mxu0 0.0
    %702 = vmatprep.subr.mxu0 0.0
    %703 = vmatpush1.msra.mxu0 0.0
    %704 = vmatprep.subr.mxu0 0.0
    %705 = vmatpush1.msra.mxu0 0.0
    %706 = vmatprep.subr.mxu0 0.0
    %707 = vmatpush1.msra.mxu0 0.0
    %708 = vmatprep.subr.mxu0 0.0
    %709 = vmatpush1.msra.mxu0 0.0
    %710 = vmatprep.mubr.f32.mxu0 0.0
    %711 = vmatmul.mubr.f32.gmra.mrb[0].mxu0 %v644
    %v712 = vpop.f32.mrb[0].mxu0
    %v713 = vadd.f32 0.0, %v712
    %v714 = vpop.f32.mrb[0].mxu0
    %715 = vdwg.mxu0
    %v717 = vrot.slane %v713, 5
    %v718 = vrot.slane %v713, 6
    %v721 = vadd.f32 %v121, %v717
    %v722 = vadd.f32 %v126, %v718
    %v723 = vtanh.pop %v721
    %v724 = vtanh.pop %v722
    %v727 = vrot.slane %v724, 7
    %vm728 = vcmask 1044484
    %v729 = vsel %vm728, %v727, %v723
    %v732 = vrot.slane %v640, 5
    %733 = vrot.lane.b32.xlu0 %v732, 32
    %v734 = vpop.permute.xlu0 %733
    %v736 = vsel %vm136, %v729, %v734
    %v738 = vrot.slane %v736, 3
    %v739 = vsel %vm229, %v738, 0
    %741 = vmatprep.subr.mxu0 0.0
    %742 = vmatpush1.msra.mxu0 %v25
    %743 = vmatprep.subr.mxu0 0.0
    %744 = vmatpush1.msra.mxu0 %v26
    %745 = vmatprep.subr.mxu0 0.0
    %746 = vmatpush1.msra.mxu0 %v27
    %747 = vmatprep.subr.mxu0 0.0
    %748 = vmatpush1.msra.mxu0 %v28
    %749 = vmatprep.subr.mxu0 0.0
    %750 = vmatpush1.msra.mxu0 %v29
    %751 = vmatprep.subr.mxu0 0.0
    %752 = vmatpush1.msra.mxu0 %v30
    %753 = vmatprep.subr.mxu0 0.0
    %754 = vmatpush1.msra.mxu0 %v31
    %755 = vmatprep.subr.mxu0 0.0
    %756 = vmatpush1.msra.mxu0 %v32
    %757 = vmatprep.subr.mxu0 0.0
    %758 = vmatpush1.msra.mxu0 0.0
    %759 = vmatprep.subr.mxu0 0.0
    %760 = vmatpush1.msra.mxu0 0.0
    %761 = vmatprep.subr.mxu0 0.0
    %762 = vmatpush1.msra.mxu0 0.0
    %763 = vmatprep.subr.mxu0 0.0
    %764 = vmatpush1.msra.mxu0 0.0
    %765 = vmatprep.subr.mxu0 0.0
    %766 = vmatpush1.msra.mxu0 0.0
    %767 = vmatprep.subr.mxu0 0.0
    %768 = vmatpush1.msra.mxu0 0.0
    %769 = vmatprep.subr.mxu0 0.0
    %770 = vmatpush1.msra.mxu0 0.0
    %771 = vmatprep.subr.mxu0 0.0
    %772 = vmatpush1.msra.mxu0 0.0
    %773 = vmatprep.subr.mxu0 0.0
    %774 = vmatpush1.msra.mxu0 0.0
    %775 = vmatprep.subr.mxu0 0.0
    %776 = vmatpush1.msra.mxu0 0.0
    %777 = vmatprep.subr.mxu0 0.0
    %778 = vmatpush1.msra.mxu0 0.0
    %779 = vmatprep.subr.mxu0 0.0
    %780 = vmatpush1.msra.mxu0 0.0
    %781 = vmatprep.subr.mxu0 0.0
    %782 = vmatpush1.msra.mxu0 0.0
    %783 = vmatprep.subr.mxu0 0.0
    %784 = vmatpush1.msra.mxu0 0.0
    %785 = vmatprep.subr.mxu0 0.0
    %786 = vmatpush1.msra.mxu0 0.0
    %787 = vmatprep.subr.mxu0 0.0
    %788 = vmatpush1.msra.mxu0 0.0
    %789 = vmatprep.subr.mxu0 0.0
    %790 = vmatpush1.msra.mxu0 0.0
    %791 = vmatprep.subr.mxu0 0.0
    %792 = vmatpush1.msra.mxu0 0.0
    %793 = vmatprep.subr.mxu0 0.0
    %794 = vmatpush1.msra.mxu0 0.0
    %795 = vmatprep.subr.mxu0 0.0
    %796 = vmatpush1.msra.mxu0 0.0
    %797 = vmatprep.subr.mxu0 0.0
    %798 = vmatpush1.msra.mxu0 0.0
    %799 = vmatprep.subr.mxu0 0.0
    %800 = vmatpush1.msra.mxu0 0.0
    %801 = vmatprep.subr.mxu0 0.0
    %802 = vmatpush1.msra.mxu0 0.0
    %803 = vmatprep.subr.mxu0 0.0
    %804 = vmatpush1.msra.mxu0 0.0
    %805 = vmatprep.mubr.f32.mxu0 0.0
    %806 = vmatmul.mubr.f32.gmra.mrb[0].mxu0 %v739
    %v807 = vpop.f32.mrb[0].mxu0
    %v808 = vadd.f32 %v135, %v807
    %v809 = vpop.f32.mrb[0].mxu0
    %810 = vdwg.mxu0
    %v811 = vtanh.pop %v808
    %v812 = vrot.slane %v723, 3
    %v813 = vrot.slane %v724, 2
    %v814 = vsel %vm221, %v813, %v812
    %v815 = vsel %vm136, %v814, 0
    %817 = vmatprep.subr.mxu0 0.0
    %818 = vmatpush1.msra.mxu0 %v21
    %819 = vmatprep.subr.mxu0 0.0
    %820 = vmatpush1.msra.mxu0 %v22
    %821 = vmatprep.subr.mxu0 0.0
    %822 = vmatpush1.msra.mxu0 %v23
    %823 = vmatprep.subr.mxu0 0.0
    %824 = vmatpush1.msra.mxu0 %v24
    %825 = vmatprep.subr.mxu0 0.0
    %826 = vmatpush1.msra.mxu0 0.0
    %827 = vmatprep.subr.mxu0 0.0
    %828 = vmatpush1.msra.mxu0 0.0
    %829 = vmatprep.subr.mxu0 0.0
    %830 = vmatpush1.msra.mxu0 0.0
    %831 = vmatprep.subr.mxu0 0.0
    %832 = vmatpush1.msra.mxu0 0.0
    %833 = vmatprep.subr.mxu0 0.0
    %834 = vmatpush1.msra.mxu0 0.0
    %835 = vmatprep.subr.mxu0 0.0
    %836 = vmatpush1.msra.mxu0 0.0
    %837 = vmatprep.subr.mxu0 0.0
    %838 = vmatpush1.msra.mxu0 0.0
    %839 = vmatprep.subr.mxu0 0.0
    %840 = vmatpush1.msra.mxu0 0.0
    %841 = vmatprep.subr.mxu0 0.0
    %842 = vmatpush1.msra.mxu0 0.0
    %843 = vmatprep.subr.mxu0 0.0
    %844 = vmatpush1.msra.mxu0 0.0
    %845 = vmatprep.subr.mxu0 0.0
    %846 = vmatpush1.msra.mxu0 0.0
    %847 = vmatprep.subr.mxu0 0.0
    %848 = vmatpush1.msra.mxu0 0.0
    %849 = vmatprep.subr.mxu0 0.0
    %850 = vmatpush1.msra.mxu0 0.0
    %851 = vmatprep.subr.mxu0 0.0
    %852 = vmatpush1.msra.mxu0 0.0
    %853 = vmatprep.subr.mxu0 0.0
    %854 = vmatpush1.msra.mxu0 0.0
    %855 = vmatprep.subr.mxu0 0.0
    %856 = vmatpush1.msra.mxu0 0.0
    %857 = vmatprep.subr.mxu0 0.0
    %858 = vmatpush1.msra.mxu0 0.0
    %859 = vmatprep.subr.mxu0 0.0
    %860 = vmatpush1.msra.mxu0 0.0
    %861 = vmatprep.subr.mxu0 0.0
    %862 = vmatpush1.msra.mxu0 0.0
    %863 = vmatprep.subr.mxu0 0.0
    %864 = vmatpush1.msra.mxu0 0.0
    %865 = vmatprep.subr.mxu0 0.0
    %866 = vmatpush1.msra.mxu0 0.0
    %867 = vmatprep.subr.mxu0 0.0
    %868 = vmatpush1.msra.mxu0 0.0
    %869 = vmatprep.subr.mxu0 0.0
    %870 = vmatpush1.msra.mxu0 0.0
    %871 = vmatprep.subr.mxu0 0.0
    %872 = vmatpush1.msra.mxu0 0.0
    %873 = vmatprep.subr.mxu0 0.0
    %874 = vmatpush1.msra.mxu0 0.0
    %875 = vmatprep.subr.mxu0 0.0
    %876 = vmatpush1.msra.mxu0 0.0
    %877 = vmatprep.subr.mxu0 0.0
    %878 = vmatpush1.msra.mxu0 0.0
    %879 = vmatprep.subr.mxu0 0.0
    %880 = vmatpush1.msra.mxu0 0.0
    %881 = vmatprep.mubr.f32.mxu0 0.0
    %882 = vmatmul.mubr.f32.gmra.mrb[0].mxu0 %v815
    %v883 = vpop.f32.mrb[0].mxu0
    %v884 = vadd.f32 0.0, %v883
    %v885 = vpop.f32.mrb[0].mxu0
    %886 = vdwg.mxu0
    %v888 = vrot.slane %v884, 4
    %v889 = vrot.slane %v884, 5
    %v892 = vadd.f32 %v121, %v888
    %v893 = vadd.f32 %v126, %v889
    %v894 = vtanh.pop %v892
    %v895 = vtanh.pop %v893
    %v898 = vrot.slane %v895, 7
    %vm899 = vcmask 1045509
    %v900 = vsel %vm899, %v898, %v894
    %v903 = vrot.slane %v811, 4
    %904 = vrot.lane.b32.xlu0 %v903, 32
    %v905 = vpop.permute.xlu0 %904
    %v907 = vsel %vm136, %v900, %v905
    %v909 = vrot.slane %v907, 4
    %v910 = vsel %vm229, %v909, 0
    %912 = vmatprep.subr.mxu0 0.0
    %913 = vmatpush1.msra.mxu0 %v25
    %914 = vmatprep.subr.mxu0 0.0
    %915 = vmatpush1.msra.mxu0 %v26
    %916 = vmatprep.subr.mxu0 0.0
    %917 = vmatpush1.msra.mxu0 %v27
    %918 = vmatprep.subr.mxu0 0.0
    %919 = vmatpush1.msra.mxu0 %v28
    %920 = vmatprep.subr.mxu0 0.0
    %921 = vmatpush1.msra.mxu0 %v29
    %922 = vmatprep.subr.mxu0 0.0
    %923 = vmatpush1.msra.mxu0 %v30
    %924 = vmatprep.subr.mxu0 0.0
    %925 = vmatpush1.msra.mxu0 %v31
    %926 = vmatprep.subr.mxu0 0.0
    %927 = vmatpush1.msra.mxu0 %v32
    %928 = vmatprep.subr.mxu0 0.0
    %929 = vmatpush1.msra.mxu0 0.0
    %930 = vmatprep.subr.mxu0 0.0
    %931 = vmatpush1.msra.mxu0 0.0
    %932 = vmatprep.subr.mxu0 0.0
    %933 = vmatpush1.msra.mxu0 0.0
    %934 = vmatprep.subr.mxu0 0.0
    %935 = vmatpush1.msra.mxu0 0.0
    %936 = vmatprep.subr.mxu0 0.0
    %937 = vmatpush1.msra.mxu0 0.0
    %938 = vmatprep.subr.mxu0 0.0
    %939 = vmatpush1.msra.mxu0 0.0
    %940 = vmatprep.subr.mxu0 0.0
    %941 = vmatpush1.msra.mxu0 0.0
    %942 = vmatprep.subr.mxu0 0.0
    %943 = vmatpush1.msra.mxu0 0.0
    %944 = vmatprep.subr.mxu0 0.0
    %945 = vmatpush1.msra.mxu0 0.0
    %946 = vmatprep.subr.mxu0 0.0
    %947 = vmatpush1.msra.mxu0 0.0
    %948 = vmatprep.subr.mxu0 0.0
    %949 = vmatpush1.msra.mxu0 0.0
    %950 = vmatprep.subr.mxu0 0.0
    %951 = vmatpush1.msra.mxu0 0.0
    %952 = vmatprep.subr.mxu0 0.0
    %953 = vmatpush1.msra.mxu0 0.0
    %954 = vmatprep.subr.mxu0 0.0
    %955 = vmatpush1.msra.mxu0 0.0
    %956 = vmatprep.subr.mxu0 0.0
    %957 = vmatpush1.msra.mxu0 0.0
    %958 = vmatprep.subr.mxu0 0.0
    %959 = vmatpush1.msra.mxu0 0.0
    %960 = vmatprep.subr.mxu0 0.0
    %961 = vmatpush1.msra.mxu0 0.0
    %962 = vmatprep.subr.mxu0 0.0
    %963 = vmatpush1.msra.mxu0 0.0
    %964 = vmatprep.subr.mxu0 0.0
    %965 = vmatpush1.msra.mxu0 0.0
    %966 = vmatprep.subr.mxu0 0.0
    %967 = vmatpush1.msra.mxu0 0.0
    %968 = vmatprep.subr.mxu0 0.0
    %969 = vmatpush1.msra.mxu0 0.0
    %970 = vmatprep.subr.mxu0 0.0
    %971 = vmatpush1.msra.mxu0 0.0
    %972 = vmatprep.subr.mxu0 0.0
    %973 = vmatpush1.msra.mxu0 0.0
    %974 = vmatprep.subr.mxu0 0.0
    %975 = vmatpush1.msra.mxu0 0.0
    %976 = vmatprep.mubr.f32.mxu0 0.0
    %977 = vmatmul.mubr.f32.gmra.mrb[0].mxu0 %v910
    %v978 = vpop.f32.mrb[0].mxu0
    %v979 = vadd.f32 %v135, %v978
    %v980 = vpop.f32.mrb[0].mxu0
    %981 = vdwg.mxu0
    %v982 = vtanh.pop %v979
    %v983 = vrot.slane %v894, 4
    %v984 = vrot.slane %v895, 3
    %v985 = vsel %vm221, %v984, %v983
    %v986 = vsel %vm136, %v985, 0
    %988 = vmatprep.subr.mxu0 0.0
    %989 = vmatpush1.msra.mxu0 %v21
    %990 = vmatprep.subr.mxu0 0.0
    %991 = vmatpush1.msra.mxu0 %v22
    %992 = vmatprep.subr.mxu0 0.0
    %993 = vmatpush1.msra.mxu0 %v23
    %994 = vmatprep.subr.mxu0 0.0
    %995 = vmatpush1.msra.mxu0 %v24
    %996 = vmatprep.subr.mxu0 0.0
    %997 = vmatpush1.msra.mxu0 0.0
    %998 = vmatprep.subr.mxu0 0.0
    %999 = vmatpush1.msra.mxu0 0.0
    %1000 = vmatprep.subr.mxu0 0.0
    %1001 = vmatpush1.msra.mxu0 0.0
    %1002 = vmatprep.subr.mxu0 0.0
    %1003 = vmatpush1.msra.mxu0 0.0
    %1004 = vmatprep.subr.mxu0 0.0
    %1005 = vmatpush1.msra.mxu0 0.0
    %1006 = vmatprep.subr.mxu0 0.0
    %1007 = vmatpush1.msra.mxu0 0.0
    %1008 = vmatprep.subr.mxu0 0.0
    %1009 = vmatpush1.msra.mxu0 0.0
    %1010 = vmatprep.subr.mxu0 0.0
    %1011 = vmatpush1.msra.mxu0 0.0
    %1012 = vmatprep.subr.mxu0 0.0
    %1013 = vmatpush1.msra.mxu0 0.0
    %1014 = vmatprep.subr.mxu0 0.0
    %1015 = vmatpush1.msra.mxu0 0.0
    %1016 = vmatprep.subr.mxu0 0.0
    %1017 = vmatpush1.msra.mxu0 0.0
    %1018 = vmatprep.subr.mxu0 0.0
    %1019 = vmatpush1.msra.mxu0 0.0
    %1020 = vmatprep.subr.mxu0 0.0
    %1021 = vmatpush1.msra.mxu0 0.0
    %1022 = vmatprep.subr.mxu0 0.0
    %1023 = vmatpush1.msra.mxu0 0.0
    %1024 = vmatprep.subr.mxu0 0.0
    %1025 = vmatpush1.msra.mxu0 0.0
    %1026 = vmatprep.subr.mxu0 0.0
    %1027 = vmatpush1.msra.mxu0 0.0
    %1028 = vmatprep.subr.mxu0 0.0
    %1029 = vmatpush1.msra.mxu0 0.0
    %1030 = vmatprep.subr.mxu0 0.0
    %1031 = vmatpush1.msra.mxu0 0.0
    %1032 = vmatprep.subr.mxu0 0.0
    %1033 = vmatpush1.msra.mxu0 0.0
    %1034 = vmatprep.subr.mxu0 0.0
    %1035 = vmatpush1.msra.mxu0 0.0
    %1036 = vmatprep.subr.mxu0 0.0
    %1037 = vmatpush1.msra.mxu0 0.0
    %1038 = vmatprep.subr.mxu0 0.0
    %1039 = vmatpush1.msra.mxu0 0.0
    %1040 = vmatprep.subr.mxu0 0.0
    %1041 = vmatpush1.msra.mxu0 0.0
    %1042 = vmatprep.subr.mxu0 0.0
    %1043 = vmatpush1.msra.mxu0 0.0
    %1044 = vmatprep.subr.mxu0 0.0
    %1045 = vmatpush1.msra.mxu0 0.0
    %1046 = vmatprep.subr.mxu0 0.0
    %1047 = vmatpush1.msra.mxu0 0.0
    %1048 = vmatprep.subr.mxu0 0.0
    %1049 = vmatpush1.msra.mxu0 0.0
    %1050 = vmatprep.subr.mxu0 0.0
    %1051 = vmatpush1.msra.mxu0 0.0
    %1052 = vmatprep.mubr.f32.mxu0 0.0
    %1053 = vmatmul.mubr.f32.gmra.mrb[0].mxu0 %v986
    %v1054 = vpop.f32.mrb[0].mxu0
    %v1055 = vadd.f32 0.0, %v1054
    %v1056 = vpop.f32.mrb[0].mxu0
    %1057 = vdwg.mxu0
    %v1059 = vrot.slane %v1055, 3
    %v1060 = vrot.slane %v1055, 4
    %v1063 = vadd.f32 %v121, %v1059
    %v1064 = vadd.f32 %v126, %v1060
    %v1065 = vtanh.pop %v1063
    %v1066 = vtanh.pop %v1064
    %v1069 = vrot.slane %v1066, 7
    %vm1070 = vcmask 1046534
    %v1071 = vsel %vm1070, %v1069, %v1065
    %v1074 = vrot.slane %v982, 3
    %1075 = vrot.lane.b32.xlu0 %v1074, 32
    %v1076 = vpop.permute.xlu0 %1075
    %v1078 = vsel %vm136, %v1071, %v1076
    %v1080 = vrot.slane %v1078, 5
    %v1081 = vsel %vm229, %v1080, 0
    %1083 = vmatprep.subr.mxu0 0.0
    %1084 = vmatpush1.msra.mxu0 %v25
    %1085 = vmatprep.subr.mxu0 0.0
    %1086 = vmatpush1.msra.mxu0 %v26
    %1087 = vmatprep.subr.mxu0 0.0
    %1088 = vmatpush1.msra.mxu0 %v27
    %1089 = vmatprep.subr.mxu0 0.0
    %1090 = vmatpush1.msra.mxu0 %v28
    %1091 = vmatprep.subr.mxu0 0.0
    %1092 = vmatpush1.msra.mxu0 %v29
    %1093 = vmatprep.subr.mxu0 0.0
    %1094 = vmatpush1.msra.mxu0 %v30
    %1095 = vmatprep.subr.mxu0 0.0
    %1096 = vmatpush1.msra.mxu0 %v31
    %1097 = vmatprep.subr.mxu0 0.0
    %1098 = vmatpush1.msra.mxu0 %v32
    %1099 = vmatprep.subr.mxu0 0.0
    %1100 = vmatpush1.msra.mxu0 0.0
    %1101 = vmatprep.subr.mxu0 0.0
    %1102 = vmatpush1.msra.mxu0 0.0
    %1103 = vmatprep.subr.mxu0 0.0
    %1104 = vmatpush1.msra.mxu0 0.0
    %1105 = vmatprep.subr.mxu0 0.0
    %1106 = vmatpush1.msra.mxu0 0.0
    %1107 = vmatprep.subr.mxu0 0.0
    %1108 = vmatpush1.msra.mxu0 0.0
    %1109 = vmatprep.subr.mxu0 0.0
    %1110 = vmatpush1.msra.mxu0 0.0
    %1111 = vmatprep.subr.mxu0 0.0
    %1112 = vmatpush1.msra.mxu0 0.0
    %1113 = vmatprep.subr.mxu0 0.0
    %1114 = vmatpush1.msra.mxu0 0.0
    %1115 = vmatprep.subr.mxu0 0.0
    %1116 = vmatpush1.msra.mxu0 0.0
    %1117 = vmatprep.subr.mxu0 0.0
    %1118 = vmatpush1.msra.mxu0 0.0
    %1119 = vmatprep.subr.mxu0 0.0
    %1120 = vmatpush1.msra.mxu0 0.0
    %1121 = vmatprep.subr.mxu0 0.0
    %1122 = vmatpush1.msra.mxu0 0.0
    %1123 = vmatprep.subr.mxu0 0.0
    %1124 = vmatpush1.msra.mxu0 0.0
    %1125 = vmatprep.subr.mxu0 0.0
    %1126 = vmatpush1.msra.mxu0 0.0
    %1127 = vmatprep.subr.mxu0 0.0
    %1128 = vmatpush1.msra.mxu0 0.0
    %1129 = vmatprep.subr.mxu0 0.0
    %1130 = vmatpush1.msra.mxu0 0.0
    %1131 = vmatprep.subr.mxu0 0.0
    %1132 = vmatpush1.msra.mxu0 0.0
    %1133 = vmatprep.subr.mxu0 0.0
    %1134 = vmatpush1.msra.mxu0 0.0
    %1135 = vmatprep.subr.mxu0 0.0
    %1136 = vmatpush1.msra.mxu0 0.0
    %1137 = vmatprep.subr.mxu0 0.0
    %1138 = vmatpush1.msra.mxu0 0.0
    %1139 = vmatprep.subr.mxu0 0.0
    %1140 = vmatpush1.msra.mxu0 0.0
    %1141 = vmatprep.subr.mxu0 0.0
    %1142 = vmatpush1.msra.mxu0 0.0
    %1143 = vmatprep.subr.mxu0 0.0
    %1144 = vmatpush1.msra.mxu0 0.0
    %1145 = vmatprep.subr.mxu0 0.0
    %1146 = vmatpush1.msra.mxu0 0.0
    %1147 = vmatprep.mubr.f32.mxu0 0.0
    %1148 = vmatmul.mubr.f32.gmra.mrb[0].mxu0 %v1081
    %v1149 = vpop.f32.mrb[0].mxu0
    %v1150 = vadd.f32 %v135, %v1149
    %v1151 = vpop.f32.mrb[0].mxu0
    %1152 = vdwg.mxu0
    %v1153 = vtanh.pop %v1150
    %v1154 = vrot.slane %v1065, 5
    %v1155 = vrot.slane %v1066, 4
    %v1156 = vsel %vm221, %v1155, %v1154
    %v1157 = vsel %vm136, %v1156, 0
    %1159 = vmatprep.subr.mxu0 0.0
    %1160 = vmatpush1.msra.mxu0 %v21
    %1161 = vmatprep.subr.mxu0 0.0
    %1162 = vmatpush1.msra.mxu0 %v22
    %1163 = vmatprep.subr.mxu0 0.0
    %1164 = vmatpush1.msra.mxu0 %v23
    %1165 = vmatprep.subr.mxu0 0.0
    %1166 = vmatpush1.msra.mxu0 %v24
    %1167 = vmatprep.subr.mxu0 0.0
    %1168 = vmatpush1.msra.mxu0 0.0
    %1169 = vmatprep.subr.mxu0 0.0
    %1170 = vmatpush1.msra.mxu0 0.0
    %1171 = vmatprep.subr.mxu0 0.0
    %1172 = vmatpush1.msra.mxu0 0.0
    %1173 = vmatprep.subr.mxu0 0.0
    %1174 = vmatpush1.msra.mxu0 0.0
    %1175 = vmatprep.subr.mxu0 0.0
    %1176 = vmatpush1.msra.mxu0 0.0
    %1177 = vmatprep.subr.mxu0 0.0
    %1178 = vmatpush1.msra.mxu0 0.0
    %1179 = vmatprep.subr.mxu0 0.0
    %1180 = vmatpush1.msra.mxu0 0.0
    %1181 = vmatprep.subr.mxu0 0.0
    %1182 = vmatpush1.msra.mxu0 0.0
    %1183 = vmatprep.subr.mxu0 0.0
    %1184 = vmatpush1.msra.mxu0 0.0
    %1185 = vmatprep.subr.mxu0 0.0
    %1186 = vmatpush1.msra.mxu0 0.0
    %1187 = vmatprep.subr.mxu0 0.0
    %1188 = vmatpush1.msra.mxu0 0.0
    %1189 = vmatprep.subr.mxu0 0.0
    %1190 = vmatpush1.msra.mxu0 0.0
    %1191 = vmatprep.subr.mxu0 0.0
    %1192 = vmatpush1.msra.mxu0 0.0
    %1193 = vmatprep.subr.mxu0 0.0
    %1194 = vmatpush1.msra.mxu0 0.0
    %1195 = vmatprep.subr.mxu0 0.0
    %1196 = vmatpush1.msra.mxu0 0.0
    %1197 = vmatprep.subr.mxu0 0.0
    %1198 = vmatpush1.msra.mxu0 0.0
    %1199 = vmatprep.subr.mxu0 0.0
    %1200 = vmatpush1.msra.mxu0 0.0
    %1201 = vmatprep.subr.mxu0 0.0
    %1202 = vmatpush1.msra.mxu0 0.0
    %1203 = vmatprep.subr.mxu0 0.0
    %1204 = vmatpush1.msra.mxu0 0.0
    %1205 = vmatprep.subr.mxu0 0.0
    %1206 = vmatpush1.msra.mxu0 0.0
    %1207 = vmatprep.subr.mxu0 0.0
    %1208 = vmatpush1.msra.mxu0 0.0
    %1209 = vmatprep.subr.mxu0 0.0
    %1210 = vmatpush1.msra.mxu0 0.0
    %1211 = vmatprep.subr.mxu0 0.0
    %1212 = vmatpush1.msra.mxu0 0.0
    %1213 = vmatprep.subr.mxu0 0.0
    %1214 = vmatpush1.msra.mxu0 0.0
    %1215 = vmatprep.subr.mxu0 0.0
    %1216 = vmatpush1.msra.mxu0 0.0
    %1217 = vmatprep.subr.mxu0 0.0
    %1218 = vmatpush1.msra.mxu0 0.0
    %1219 = vmatprep.subr.mxu0 0.0
    %1220 = vmatpush1.msra.mxu0 0.0
    %1221 = vmatprep.subr.mxu0 0.0
    %1222 = vmatpush1.msra.mxu0 0.0
    %1223 = vmatprep.mubr.f32.mxu0 0.0
    %1224 = vmatmul.mubr.f32.gmra.mrb[0].mxu0 %v1157
    %v1225 = vpop.f32.mrb[0].mxu0
    %v1226 = vadd.f32 0.0, %v1225
    %v1227 = vpop.f32.mrb[0].mxu0
    %1228 = vdwg.mxu0
    %v1230 = vrot.slane %v1226, 2
    %v1231 = vrot.slane %v1226, 3
    %v1234 = vadd.f32 %v121, %v1230
    %v1235 = vadd.f32 %v126, %v1231
    %v1236 = vtanh.pop %v1234
    %v1237 = vtanh.pop %v1235
    %v1240 = vrot.slane %v1237, 7
    %vm1241 = vcmask 1047559
    %v1242 = vsel %vm1241, %v1240, %v1236
    %v1245 = vrot.slane %v1153, 2
    %1246 = vrot.lane.b32.xlu0 %v1245, 32
    %v1247 = vpop.permute.xlu0 %1246
    %v1249 = vsel %vm136, %v1242, %v1247
    %v1251 = vrot.slane %v1249, 6
    %v1252 = vsel %vm229, %v1251, 0
    %1254 = vmatprep.subr.mxu0 0.0
    %1255 = vmatpush1.msra.mxu0 %v25
    %1256 = vmatprep.subr.mxu0 0.0
    %1257 = vmatpush1.msra.mxu0 %v26
    %1258 = vmatprep.subr.mxu0 0.0
    %1259 = vmatpush1.msra.mxu0 %v27
    %1260 = vmatprep.subr.mxu0 0.0
    %1261 = vmatpush1.msra.mxu0 %v28
    %1262 = vmatprep.subr.mxu0 0.0
    %1263 = vmatpush1.msra.mxu0 %v29
    %1264 = vmatprep.subr.mxu0 0.0
    %1265 = vmatpush1.msra.mxu0 %v30
    %1266 = vmatprep.subr.mxu0 0.0
    %1267 = vmatpush1.msra.mxu0 %v31
    %1268 = vmatprep.subr.mxu0 0.0
    %1269 = vmatpush1.msra.mxu0 %v32
    %1270 = vmatprep.subr.mxu0 0.0
    %1271 = vmatpush1.msra.mxu0 0.0
    %1272 = vmatprep.subr.mxu0 0.0
    %1273 = vmatpush1.msra.mxu0 0.0
    %1274 = vmatprep.subr.mxu0 0.0
    %1275 = vmatpush1.msra.mxu0 0.0
    %1276 = vmatprep.subr.mxu0 0.0
    %1277 = vmatpush1.msra.mxu0 0.0
    %1278 = vmatprep.subr.mxu0 0.0
    %1279 = vmatpush1.msra.mxu0 0.0
    %1280 = vmatprep.subr.mxu0 0.0
    %1281 = vmatpush1.msra.mxu0 0.0
    %1282 = vmatprep.subr.mxu0 0.0
    %1283 = vmatpush1.msra.mxu0 0.0
    %1284 = vmatprep.subr.mxu0 0.0
    %1285 = vmatpush1.msra.mxu0 0.0
    %1286 = vmatprep.subr.mxu0 0.0
    %1287 = vmatpush1.msra.mxu0 0.0
    %1288 = vmatprep.subr.mxu0 0.0
    %1289 = vmatpush1.msra.mxu0 0.0
    %1290 = vmatprep.subr.mxu0 0.0
    %1291 = vmatpush1.msra.mxu0 0.0
    %1292 = vmatprep.subr.mxu0 0.0
    %1293 = vmatpush1.msra.mxu0 0.0
    %1294 = vmatprep.subr.mxu0 0.0
    %1295 = vmatpush1.msra.mxu0 0.0
    %1296 = vmatprep.subr.mxu0 0.0
    %1297 = vmatpush1.msra.mxu0 0.0
    %1298 = vmatprep.subr.mxu0 0.0
    %1299 = vmatpush1.msra.mxu0 0.0
    %1300 = vmatprep.subr.mxu0 0.0
    %1301 = vmatpush1.msra.mxu0 0.0
    %1302 = vmatprep.subr.mxu0 0.0
    %1303 = vmatpush1.msra.mxu0 0.0
    %1304 = vmatprep.subr.mxu0 0.0
    %1305 = vmatpush1.msra.mxu0 0.0
    %1306 = vmatprep.subr.mxu0 0.0
    %1307 = vmatpush1.msra.mxu0 0.0
    %1308 = vmatprep.subr.mxu0 0.0
    %1309 = vmatpush1.msra.mxu0 0.0
    %1310 = vmatprep.subr.mxu0 0.0
    %1311 = vmatpush1.msra.mxu0 0.0
    %1312 = vmatprep.subr.mxu0 0.0
    %1313 = vmatpush1.msra.mxu0 0.0
    %1314 = vmatprep.subr.mxu0 0.0
    %1315 = vmatpush1.msra.mxu0 0.0
    %1316 = vmatprep.subr.mxu0 0.0
    %1317 = vmatpush1.msra.mxu0 0.0
    %1318 = vmatprep.mubr.f32.mxu0 0.0
    %1319 = vmatmul.mubr.f32.gmra.mrb[0].mxu0 %v1252
    %v1320 = vpop.f32.mrb[0].mxu0
    %v1321 = vadd.f32 %v135, %v1320
    %v1322 = vpop.f32.mrb[0].mxu0
    %1323 = vdwg.mxu0
    %v1324 = vtanh.pop %v1321
    %v1325 = vrot.slane %v1236, 6
    %v1326 = vrot.slane %v1237, 5
    %v1327 = vsel %vm221, %v1326, %v1325
    %v1328 = vsel %vm136, %v1327, 0
    %1330 = vmatprep.subr.mxu0 0.0
    %1331 = vmatpush1.msra.mxu0 %v21
    %1332 = vmatprep.subr.mxu0 0.0
    %1333 = vmatpush1.msra.mxu0 %v22
    %1334 = vmatprep.subr.mxu0 0.0
    %1335 = vmatpush1.msra.mxu0 %v23
    %1336 = vmatprep.subr.mxu0 0.0
    %1337 = vmatpush1.msra.mxu0 %v24
    %1338 = vmatprep.subr.mxu0 0.0
    %1339 = vmatpush1.msra.mxu0 0.0
    %1340 = vmatprep.subr.mxu0 0.0
    %1341 = vmatpush1.msra.mxu0 0.0
    %1342 = vmatprep.subr.mxu0 0.0
    %1343 = vmatpush1.msra.mxu0 0.0
    %1344 = vmatprep.subr.mxu0 0.0
    %1345 = vmatpush1.msra.mxu0 0.0
    %1346 = vmatprep.subr.mxu0 0.0
    %1347 = vmatpush1.msra.mxu0 0.0
    %1348 = vmatprep.subr.mxu0 0.0
    %1349 = vmatpush1.msra.mxu0 0.0
    %1350 = vmatprep.subr.mxu0 0.0
    %1351 = vmatpush1.msra.mxu0 0.0
    %1352 = vmatprep.subr.mxu0 0.0
    %1353 = vmatpush1.msra.mxu0 0.0
    %1354 = vmatprep.subr.mxu0 0.0
    %1355 = vmatpush1.msra.mxu0 0.0
    %1356 = vmatprep.subr.mxu0 0.0
    %1357 = vmatpush1.msra.mxu0 0.0
    %1358 = vmatprep.subr.mxu0 0.0
    %1359 = vmatpush1.msra.mxu0 0.0
    %1360 = vmatprep.subr.mxu0 0.0
    %1361 = vmatpush1.msra.mxu0 0.0
    %1362 = vmatprep.subr.mxu0 0.0
    %1363 = vmatpush1.msra.mxu0 0.0
    %1364 = vmatprep.subr.mxu0 0.0
    %1365 = vmatpush1.msra.mxu0 0.0
    %1366 = vmatprep.subr.mxu0 0.0
    %1367 = vmatpush1.msra.mxu0 0.0
    %1368 = vmatprep.subr.mxu0 0.0
    %1369 = vmatpush1.msra.mxu0 0.0
    %1370 = vmatprep.subr.mxu0 0.0
    %1371 = vmatpush1.msra.mxu0 0.0
    %1372 = vmatprep.subr.mxu0 0.0
    %1373 = vmatpush1.msra.mxu0 0.0
    %1374 = vmatprep.subr.mxu0 0.0
    %1375 = vmatpush1.msra.mxu0 0.0
    %1376 = vmatprep.subr.mxu0 0.0
    %1377 = vmatpush1.msra.mxu0 0.0
    %1378 = vmatprep.subr.mxu0 0.0
    %1379 = vmatpush1.msra.mxu0 0.0
    %1380 = vmatprep.subr.mxu0 0.0
    %1381 = vmatpush1.msra.mxu0 0.0
    %1382 = vmatprep.subr.mxu0 0.0
    %1383 = vmatpush1.msra.mxu0 0.0
    %1384 = vmatprep.subr.mxu0 0.0
    %1385 = vmatpush1.msra.mxu0 0.0
    %1386 = vmatprep.subr.mxu0 0.0
    %1387 = vmatpush1.msra.mxu0 0.0
    %1388 = vmatprep.subr.mxu0 0.0
    %1389 = vmatpush1.msra.mxu0 0.0
    %1390 = vmatprep.subr.mxu0 0.0
    %1391 = vmatpush1.msra.mxu0 0.0
    %1392 = vmatprep.subr.mxu0 0.0
    %1393 = vmatpush1.msra.mxu0 0.0
    %1394 = vmatprep.mubr.f32.mxu0 0.0
    %1395 = vmatmul.mubr.f32.gmra.mrb[0].mxu0 %v1328
    %v1396 = vpop.f32.mrb[0].mxu0
    %v1397 = vadd.f32 0.0, %v1396
    %v1398 = vpop.f32.mrb[0].mxu0
    %1399 = vdwg.mxu0
    %v1401 = vrot.slane %v1397, 1
    %v1402 = vrot.slane %v1397, 2
    %v1405 = vadd.f32 %v121, %v1401
    %v1406 = vadd.f32 %v126, %v1402
    %v1407 = vtanh.pop %v1405
    %v1408 = vtanh.pop %v1406
    %v1411 = vrot.slane %v1408, 7
    %v1415 = vrot.slane %v1324, 1
    %1416 = vrot.lane.b32.xlu0 %v1415, 32
    %v1417 = vpop.permute.xlu0 %1416
    %v1419 = vsel %vm136, %v1407, %v1417
    %v1420 = vsel %vm136, %v1411, %v1417
    %vm1423 = vcmask 1040384
    %v1424 = vrot.slane %v1419, 7
    %v1425 = vrot.slane %v1420, 7
    %v1426 = vsel %vm1423, %v1424, %v1425
    %v1427 = vsel %vm229, %v1426, 0
    %1429 = vmatprep.subr.mxu0 0.0
    %1430 = vmatpush1.msra.mxu0 %v25
    %1431 = vmatprep.subr.mxu0 0.0
    %1432 = vmatpush1.msra.mxu0 %v26
    %1433 = vmatprep.subr.mxu0 0.0
    %1434 = vmatpush1.msra.mxu0 %v27
    %1435 = vmatprep.subr.mxu0 0.0
    %1436 = vmatpush1.msra.mxu0 %v28
    %1437 = vmatprep.subr.mxu0 0.0
    %1438 = vmatpush1.msra.mxu0 %v29
    %1439 = vmatprep.subr.mxu0 0.0
    %1440 = vmatpush1.msra.mxu0 %v30
    %1441 = vmatprep.subr.mxu0 0.0
    %1442 = vmatpush1.msra.mxu0 %v31
    %1443 = vmatprep.subr.mxu0 0.0
    %1444 = vmatpush1.msra.mxu0 %v32
    %1445 = vmatprep.subr.mxu0 0.0
    %1446 = vmatpush1.msra.mxu0 0.0
    %1447 = vmatprep.subr.mxu0 0.0
    %1448 = vmatpush1.msra.mxu0 0.0
    %1449 = vmatprep.subr.mxu0 0.0
    %1450 = vmatpush1.msra.mxu0 0.0
    %1451 = vmatprep.subr.mxu0 0.0
    %1452 = vmatpush1.msra.mxu0 0.0
    %1453 = vmatprep.subr.mxu0 0.0
    %1454 = vmatpush1.msra.mxu0 0.0
    %1455 = vmatprep.subr.mxu0 0.0
    %1456 = vmatpush1.msra.mxu0 0.0
    %1457 = vmatprep.subr.mxu0 0.0
    %1458 = vmatpush1.msra.mxu0 0.0
    %1459 = vmatprep.subr.mxu0 0.0
    %1460 = vmatpush1.msra.mxu0 0.0
    %1461 = vmatprep.subr.mxu0 0.0
    %1462 = vmatpush1.msra.mxu0 0.0
    %1463 = vmatprep.subr.mxu0 0.0
    %1464 = vmatpush1.msra.mxu0 0.0
    %1465 = vmatprep.subr.mxu0 0.0
    %1466 = vmatpush1.msra.mxu0 0.0
    %1467 = vmatprep.subr.mxu0 0.0
    %1468 = vmatpush1.msra.mxu0 0.0
    %1469 = vmatprep.subr.mxu0 0.0
    %1470 = vmatpush1.msra.mxu0 0.0
    %1471 = vmatprep.subr.mxu0 0.0
    %1472 = vmatpush1.msra.mxu0 0.0
    %1473 = vmatprep.subr.mxu0 0.0
    %1474 = vmatpush1.msra.mxu0 0.0
    %1475 = vmatprep.subr.mxu0 0.0
    %1476 = vmatpush1.msra.mxu0 0.0
    %1477 = vmatprep.subr.mxu0 0.0
    %1478 = vmatpush1.msra.mxu0 0.0
    %1479 = vmatprep.subr.mxu0 0.0
    %1480 = vmatpush1.msra.mxu0 0.0
    %1481 = vmatprep.subr.mxu0 0.0
    %1482 = vmatpush1.msra.mxu0 0.0
    %1483 = vmatprep.subr.mxu0 0.0
    %1484 = vmatpush1.msra.mxu0 0.0
    %1485 = vmatprep.subr.mxu0 0.0
    %1486 = vmatpush1.msra.mxu0 0.0
    %1487 = vmatprep.subr.mxu0 0.0
    %1488 = vmatpush1.msra.mxu0 0.0
    %1489 = vmatprep.subr.mxu0 0.0
    %1490 = vmatpush1.msra.mxu0 0.0
    %1491 = vmatprep.subr.mxu0 0.0
    %1492 = vmatpush1.msra.mxu0 0.0
    %1493 = vmatprep.mubr.f32.mxu0 0.0
    %1494 = vmatmul.mubr.f32.gmra.mrb[0].mxu0 %v1427
    %v1495 = vpop.f32.mrb[0].mxu0
    %v1496 = vadd.f32 %v135, %v1495
    %v1497 = vpop.f32.mrb[0].mxu0
    %1498 = vdwg.mxu0
    %v1499 = vtanh.pop %v1496
    %1500 = vrot.lane.b32.xlu0 %v470, 32
    %v1501 = vpop.permute.xlu0 %1500
    %1503 = vrot.lane.b32.xlu0 %v640, 64
    %v1504 = vpop.permute.xlu0 %1503
    %1506 = vrot.lane.b32.xlu0 %v811, 96
    %v1507 = vpop.permute.xlu0 %1506
    %1509 = vrot.lane.b32.xlu0 %v1153, 32
    %v1510 = vpop.permute.xlu0 %1509
    %1512 = vrot.lane.b32.xlu0 %v1324, 64
    %v1513 = vpop.permute.xlu0 %1512
    %1516 = vrot.lane.b32.xlu0 %v1499, 96
    %v1517 = vpop.permute.xlu0 %1516
    %v1519 = vsel %vm136, %v303, %v1501
    %v1520 = vsel %vm229, %v1519, %v1504
    %vm1521 = vcmask 785408
    %v1522 = vsel %vm1521, %v1520, %v1507
    %v1523 = vsel %vm136, %v982, %v1510
    %v1524 = vsel %vm229, %v1523, %v1513
    %v1525 = vsel %vm1521, %v1524, %v1517
    %v1528 = vcombine.low %v1522, %v1525
    %v1530 = vunpack.c.l.s4 1983009808
    %v1531 = vunpack.c.0.s8 %v1530
    %v1532 = vlaneseq
    %v1533 = vshrl.u32 %v1532, 7
    %v1534 = vsub.s32 %v1531, %v1533
    %v1535 = vrot.slane %v1528, %v1534
    %1537 = vst [vmem:[%s3] sm:$0xf] %v1535
    %vm1538 = vcmask 261127
    %1539 = vst.msk [vmem:[#allocation2 - $0x7] sm:$0x80] %vm1538, %v1407
    %vm1540 = vcmask 253952
    %1541 = vst.msk [vmem:[#allocation2 + $0x1] sm:$0x1] %vm1540, %v1411
    %s1542 = scalar_lea.vmem [#allocation2], 2
    %vm1543 = vcmask 254976
    %1544 = vst.msk [vmem:[%s1542] sm:$0x3] %vm1543, %v1499
    %v1545 = vlaneseq
    %v1546 = vshrl.u32 %v1545, 7
    %v1547 = vsub.s32 0, %v1546
    %v1548 = vrot.slane %v35, %v1547
    %v1549 = vmul.f32 %v1499, %v1548
    %v1550 = vsel %vm1543, %v1549, 0.0
    %1551 = vadd.xlane.f32.xlu0 %v1550
    %v1552 = vpop.xlane.xlu0 %1551
    %v1553 = vlaneseq
    %v1554 = vshrl.u32 %v1553, 7
    %v1555 = vsub.s32 0, %v1554
    %v1556 = vrot.slane %v36, %v1555
    %v1557 = vadd.f32 %v1552, %v1556
    %vm1558 = vcmask 1024
    %1559 = vst.msk [vmem:[%s4] sm:$0x3] %vm1558, %v1557
    // Predicated region
    $region14: #{rnn_forward.1} parent=1 // pred_check
      _
    $region15: #{rnn_forward.1} parent=1 // pred_check_branch
      %1561 = sbr.rel (0) target = $region17
    $region16: #{rnn_forward.1} parent=1 // pred_region
      _
    $region17: #{rnn_forward.1} parent=1 // pred_fallthru
      _
    // Predicated region
    $region18: #{rnn_forward.1} parent=1 // pred_check
      _
    $region19: #{rnn_forward.1} parent=1 // pred_check_branch
      %1563 = sbr.rel (0) target = $region21
    $region20: #{rnn_forward.1} parent=1 // pred_region
      _
    $region21: #{rnn_forward.1} parent=1 // pred_fallthru
      _
    // Predicated region
    $region22: #{rnn_forward.1} parent=1 // pred_check
      _
    $region23: #{rnn_forward.1} parent=1 // pred_check_branch
      %1565 = sbr.rel (0) target = $region25
    $region24: #{rnn_forward.1} parent=1 // pred_region
      %s1567 = ssub.s32 64, 64
      %1568 = vsyncadd [#allocation3], %s1567
      %s1569 = sshll.u32 [#allocation2], 4
      %s1570 = int_to_ptr.vmem [resolvable:$true] %s1569
      %1575 = dma.vmem_to_hbm [thread:$0]  %s1570, 64, %s5, [#allocation3], 32, 32, 2
    $region25: #{rnn_forward.1} parent=1 // pred_fallthru
      _
    // Predicated region
    $region26: #{rnn_forward.1} parent=1 // pred_check
      _
    $region27: #{rnn_forward.1} parent=1 // pred_check_branch
      %1577 = sbr.rel (0) target = $region29
    $region28: #{rnn_forward.1} parent=1 // pred_region
      _
    $region29: #{rnn_forward.1} parent=1 // pred_fallthru
      _
    // Predicated region
    $region30: #{rnn_forward.1} parent=1 // pred_check
      _
    $region31: #{rnn_forward.1} parent=1 // pred_check_branch
      %1579 = sbr.rel (0) target = $region33
    $region32: #{rnn_forward.1} parent=1 // pred_region
      _
    $region33: #{rnn_forward.1} parent=1 // pred_fallthru
      _
    // Predicated region
    $region34: #{rnn_forward.1} parent=1 // pred_check
      _
    $region35: #{rnn_forward.1} parent=1 // pred_check_branch
      %1581 = sbr.rel (0) target = $region37
    $region36: #{rnn_forward.1} parent=1 // pred_region
      %1582 = dma.done [#allocation3], 64
    $region37: #{rnn_forward.1} parent=1 // pred_fallthru
      _
    %1583 = vsyncpa [#allocation3], 1

</llo_original>
